<compile_context>
chip_gen: v6e
topology: v6e:2x2x1
jax: 0.10.0
libtpu: 0.0.40
codegen_flags: <defaults>
</compile_context>

<pallas_src>
import jax
import jax.numpy as jnp
from jax.experimental import pallas as pl
from jax.experimental.pallas import tpu as pltpu

PAD = 16       # halo rows per side (>= max conv padding 3); = bf16 sublane tile for alignment
LANE = 128


def _round_up(x, m):
    return (x + m - 1) // m * m


def _vmem_limit_bytes():
    cap = 64 * 1024 * 1024
    try:
        info = pltpu.get_tpu_info()
        cap = int(getattr(info, "vmem_capacity_bytes", cap))
    except Exception:
        pass
    # leave ~1/8 headroom for compiler-internal scratch: v5e/v6e -> 112 MiB, v7x -> 56 MiB
    return min(cap - cap // 8, 112 * 1024 * 1024)


def residual_block_kernel(x_ref,
                          w1_ref, g1_ref, b1_ref,
                          w2_ref, g2_ref, b2_ref,
                          w3_ref, g3_ref, b3_ref,
                          wsc_ref, gsc_ref, bsc_ref,
                          o_ref,
                          hbuf):
    """x_ref: (N, L+2*PAD, CP) bf16, zero halo + zero channel pad.
       w*_ref: (K*CP, CP) bf16 packed conv weights; g/b: (1, CP) f32.
       o_ref:  (N, L, CP) f32.  hbuf: (N, L+2*PAD, CP) bf16 scratch (reused)."""
    N, Lp, CP = x_ref.shape
    L = Lp - 2 * PAD
    NL = N * L
    inv_n = jnp.float32(1.0 / NL)

    def conv_bn(buf_ref, K, pad, w_ref, g_ref, b_ref, relu):
        s0 = PAD - pad

        def view(k):                                     # shifted (NL, CP) bf16 view
            return buf_ref[:, s0 + k: s0 + k + L, :].reshape(NL, CP)

        def tap_dot(k0, width):                          # one accumulating bf16 MXU dot
            lhs = view(k0) if width == 1 else jnp.concatenate(
                [view(k0), view(k0 + 1)], axis=-1)       # (NL, width*CP) bf16
            rhs = w_ref[k0 * CP:(k0 + width) * CP, :]    # static, sublane-aligned slice
            return jnp.dot(lhs, rhs, preferred_element_type=jnp.float32)

        groups = [(k, 2) for k in range(0, K - 1, 2)]    # pairwise taps: depth 2*CP
        if K % 2 == 1:
            groups.append((K - 1, 1))
        acc = tap_dot(*groups[0])
        for g in groups[1:]:
            acc = acc + tap_dot(*g)                      # (NL, CP) f32 accumulator

        # training-mode BN (batch stats over N*L, biased variance, eps=1e-5),
        # centred two-pass variance, gamma*rsqrt folded into one scale/shift FMA
        mean = jnp.sum(acc, axis=0, keepdims=True) * inv_n
        d = acc - mean
        var = jnp.sum(d * d, axis=0, keepdims=True) * inv_n
        scale = g_ref[...] * jax.lax.rsqrt(var + jnp.float32(1e-5))
        y = d * scale + b_ref[...]
        if relu:
            y = jnp.maximum(y, 0.0)
        return y                                         # (NL, CP) f32

    # zero only the halo rows of hbuf; the interior (incl. zero channel-pad lanes,
    # which BN maps to exact zeros since gamma/beta are zero-padded) is overwritten
    hbuf[:, :PAD, :] = jnp.zeros((N, PAD, CP), hbuf.dtype)
    hbuf[:, PAD + L:, :] = jnp.zeros((N, PAD, CP), hbuf.dtype)

    # main branch: conv7-bn-relu -> conv5-bn-relu -> conv3-bn, reusing one padded buffer
    h = conv_bn(x_ref, 7, 3, w1_ref, g1_ref, b1_ref, relu=True)
    hbuf[:, PAD:PAD + L, :] = h.reshape(N, L, CP).astype(hbuf.dtype)
    h = conv_bn(hbuf, 5, 2, w2_ref, g2_ref, b2_ref, relu=True)
    hbuf[:, PAD:PAD + L, :] = h.reshape(N, L, CP).astype(hbuf.dtype)
    h = conv_bn(hbuf, 3, 1, w3_ref, g3_ref, b3_ref, relu=False)
    o_ref[...] = h.reshape(N, L, CP)

    # shortcut (conv1x1 + BN on the untouched input), fused residual add + final ReLU
    s = conv_bn(x_ref, 1, 0, wsc_ref, gsc_ref, bsc_ref, relu=False)
    o_ref[...] = jnp.maximum(o_ref[...] + s.reshape(N, L, CP), 0.0)


@jax.jit
def residual_block(x_ncl, params):
    """x_ncl: (N, Cin, L) float32 (PyTorch layout).  Returns (N, Cout, L) float32."""
    N, Cin, L = x_ncl.shape
    Cout = params["w1"].shape[2]
    CP = _round_up(max(Cin, Cout, LANE), LANE)

    # --- wrapper-side prep (fused by XLA under jit): NCL->NLC, pad L by PAD on each
    #     side, pad channels to the lane boundary, bf16 activations + packed weights.
    x_nlc = jnp.transpose(x_ncl, (0, 2, 1)).astype(jnp.bfloat16)           # (N, L, Cin)
    xp = jnp.zeros((N, L + 2 * PAD, CP), jnp.bfloat16)
    xp = xp.at[:, PAD:PAD + L, :Cin].set(x_nlc)

    def pack_w(w):                       # (K, Ci, Co) f32 -> (K*CP, CP) bf16
        K, ci, co = w.shape
        wp = jnp.zeros((K, CP, CP), jnp.float32).at[:, :ci, :co].set(w)
        return wp.reshape(K * CP, CP).astype(jnp.bfloat16)

    def pack_v(v):                       # (1, Co) f32 -> (1, CP) f32 (zero-padded)
        co = v.shape[1]
        return jnp.zeros((1, CP), jnp.float32).at[:, :co].set(v)

    args = (xp,
            pack_w(params["w1"]), pack_v(params["g1"]), pack_v(params["b1"]),
            pack_w(params["w2"]), pack_v(params["g2"]), pack_v(params["b2"]),
            pack_w(params["w3"]), pack_v(params["g3"]), pack_v(params["b3"]),
            pack_w(params["wsc"]), pack_v(params["gsc"]), pack_v(params["bsc"]))

    vmem = pl.BlockSpec(memory_space=pltpu.MemorySpace.VMEM)
    out_nlc = pl.pallas_call(
        residual_block_kernel,
        out_shape=jax.ShapeDtypeStruct((N, L, CP), jnp.float32),
        in_specs=[vmem] * len(args),
        out_specs=vmem,
        scratch_shapes=[
            pltpu.VMEM((N, L + 2 * PAD, CP), jnp.bfloat16),   # padded activation buf (reused)
        ],
        compiler_params=pltpu.CompilerParams(
            vmem_limit_bytes=_vmem_limit_bytes()),
    )(*args)

    # slice off padded channels, restore PyTorch NCL layout (fused slice+transpose)
    return jnp.transpose(out_nlc[:, :, :Cout], (0, 2, 1))


def init_params(key, in_channels, out_channels):
    """Deterministic synthetic parameters (shapes match the PyTorch module)."""
    ks = jax.random.split(key, 12)

    def conv_w(k, cout, cin, ksz):
        # PyTorch weight layout (Cout, Cin, K); store transposed as (K, Cin, Cout).
        fan_in = cin * ksz
        w = jax.random.normal(k, (cout, cin, ksz), jnp.float32) / jnp.sqrt(fan_in)
        return jnp.transpose(w, (2, 1, 0))

    def bn_gb(kg, kb, c):
        gamma = 1.0 + 0.1 * jax.random.normal(kg, (1, c), jnp.float32)
        beta = 0.1 * jax.random.normal(kb, (1, c), jnp.float32)
        return gamma, beta

    g1, b1 = bn_gb(ks[1], ks[2], out_channels)
    g2, b2 = bn_gb(ks[4], ks[5], out_channels)
    g3, b3 = bn_gb(ks[7], ks[8], out_channels)
    gsc, bsc = bn_gb(ks[10], ks[11], out_channels)
    return {
        "w1": conv_w(ks[0], out_channels, in_channels, 7), "g1": g1, "b1": b1,
        "w2": conv_w(ks[3], out_channels, out_channels, 5), "g2": g2, "b2": b2,
        "w3": conv_w(ks[6], out_channels, out_channels, 3), "g3": g3, "b3": b3,
        "wsc": conv_w(ks[9], out_channels, in_channels, 1), "gsc": gsc, "bsc": bsc,
    }


def _reference(x_ncl, params):
    """Pure-JAX f32 reference (training-mode BN with batch stats, biased variance)."""
    def conv_bn(x, w_kio, g, b, pad, relu):
        w_oik = jnp.transpose(w_kio, (2, 1, 0))                 # (Co, Ci, K)
        y = jax.lax.conv_general_dilated(
            x, w_oik, window_strides=(1,), padding=[(pad, pad)],
            dimension_numbers=("NCH", "OIH", "NCH"))
        mean = jnp.mean(y, axis=(0, 2), keepdims=True)
        var = jnp.mean((y - mean) ** 2, axis=(0, 2), keepdims=True)
        y = (y - mean) * jax.lax.rsqrt(var + 1e-5)
        y = y * g.reshape(1, -1, 1) + b.reshape(1, -1, 1)
        return jnp.maximum(y, 0.0) if relu else y

    h = conv_bn(x_ncl, params["w1"], params["g1"], params["b1"], 3, True)
    h = conv_bn(h, params["w2"], params["g2"], params["b2"], 2, True)
    h = conv_bn(h, params["w3"], params["g3"], params["b3"], 1, False)
    s = conv_bn(x_ncl, params["wsc"], params["gsc"], params["bsc"], 0, False)
    return jnp.maximum(h + s, 0.0)


if __name__ == "__main__":
    key = jax.random.PRNGKey(0)
    k_x, k_p = jax.random.split(key)

    N, Cin, Cout, L = 2, 4, 8, 16
    x = jax.random.normal(k_x, (N, Cin, L), jnp.float32)   # PyTorch NCL layout
    params = init_params(k_p, Cin, Cout)

    y = residual_block(x, params)
    y = jax.block_until_ready(y)

    assert y.shape == (N, Cout, L)
    assert bool(jnp.all(jnp.isfinite(y)))
    assert bool(jnp.all(y >= 0.0))  # final ReLU

    # checks vs f32 reference (kernel uses bf16 MXU inputs + bf16 activation buffers)
    y_ref = _reference(x, params)
    err = jnp.abs(y - y_ref)
    max_abs = float(jnp.max(err))
    max_rel = float(jnp.max(err / (jnp.abs(y_ref) + 0.25)))
    assert max_abs < 0.2, f"max abs err vs reference: {max_abs}"
    assert max_rel < 0.25, f"max rel err vs reference: {max_rel}"

    print("KERNEL_OK")
</pallas_src>

<mosaic_0001>
module attributes {stable_mosaic.version = 11 : i64} {
  func.func @residual_block_kernel(%arg0: memref<2x48x128xbf16, #tpu.memory_space<vmem>>, %arg1: memref<896x128xbf16, #tpu.memory_space<vmem>>, %arg2: memref<1x128xf32, #tpu.memory_space<vmem>>, %arg3: memref<1x128xf32, #tpu.memory_space<vmem>>, %arg4: memref<640x128xbf16, #tpu.memory_space<vmem>>, %arg5: memref<1x128xf32, #tpu.memory_space<vmem>>, %arg6: memref<1x128xf32, #tpu.memory_space<vmem>>, %arg7: memref<384x128xbf16, #tpu.memory_space<vmem>>, %arg8: memref<1x128xf32, #tpu.memory_space<vmem>>, %arg9: memref<1x128xf32, #tpu.memory_space<vmem>>, %arg10: memref<128x128xbf16, #tpu.memory_space<vmem>>, %arg11: memref<1x128xf32, #tpu.memory_space<vmem>>, %arg12: memref<1x128xf32, #tpu.memory_space<vmem>>, %arg13: memref<2x16x128xf32, #tpu.memory_space<vmem>>, %arg14: memref<2x48x128xbf16, #tpu.memory_space<vmem>>) attributes {dimension_semantics = [], scalar_prefetch = 0 : i64, scratch_operands = 1 : i64, tpu.core_type = #tpu.core_type<tc>} {
    %cst = arith.constant 0.000000e+00 : bf16
    %0 = vector.broadcast %cst : bf16 to vector<2x16x128xbf16>
    %c0 = arith.constant 0 : index
    %c0_0 = arith.constant 0 : index
    %c0_1 = arith.constant 0 : index
    %1 = vector.load %arg14[%c0, %c0_0, %c0_1] : memref<2x48x128xbf16, #tpu.memory_space<vmem>>, vector<2x16x128xbf16>
    tpu.vector_store %arg14[%c0, %c0_0, %c0_1], %0 {strides = array<i32>} : memref<2x48x128xbf16, #tpu.memory_space<vmem>>, vector<2x16x128xbf16>,
    %cst_2 = arith.constant 0.000000e+00 : bf16
    %2 = vector.broadcast %cst_2 : bf16 to vector<2x16x128xbf16>
    %c0_3 = arith.constant 0 : index
    %c32 = arith.constant 32 : index
    %c0_4 = arith.constant 0 : index
    %3 = vector.load %arg14[%c0_3, %c32, %c0_4] : memref<2x48x128xbf16, #tpu.memory_space<vmem>>, vector<2x16x128xbf16>
    tpu.vector_store %arg14[%c0_3, %c32, %c0_4], %2 {strides = array<i32>} : memref<2x48x128xbf16, #tpu.memory_space<vmem>>, vector<2x16x128xbf16>,
    %c0_5 = arith.constant 0 : index
    %c13 = arith.constant 13 : index
    %c0_6 = arith.constant 0 : index
    %4 = vector.load %arg0[%c0_5, %c13, %c0_6] : memref<2x48x128xbf16, #tpu.memory_space<vmem>>, vector<2x16x128xbf16>
    %5 = vector.shape_cast %4 : vector<2x16x128xbf16> to vector<32x128xbf16>
    %c0_7 = arith.constant 0 : index
    %c14 = arith.constant 14 : index
    %c0_8 = arith.constant 0 : index
    %6 = vector.load %arg0[%c0_7, %c14, %c0_8] : memref<2x48x128xbf16, #tpu.memory_space<vmem>>, vector<2x16x128xbf16>
    %7 = vector.shape_cast %6 : vector<2x16x128xbf16> to vector<32x128xbf16>
    %8 = tpu.concatenate %5, %7 in 1 : vector<32x128xbf16>, vector<32x128xbf16> -> vector<32x256xbf16>
    %c0_9 = arith.constant 0 : index
    %c0_10 = arith.constant 0 : index
    %9 = vector.load %arg1[%c0_9, %c0_10] : memref<896x128xbf16, #tpu.memory_space<vmem>>, vector<256x128xbf16>
    %cst_11 = arith.constant dense<0.000000e+00> : vector<32x128xf32>
    %10 = tpu.matmul %8, %9, %cst_11 {dimension_numbers = #tpu.dot_dimension_numbers<[1], [0], [0], [1], [0, 0, 1, 1], [], []>} : vector<32x256xbf16>, vector<256x128xbf16>, vector<32x128xf32> -> vector<32x128xf32>
    %c0_12 = arith.constant 0 : index
    %c15 = arith.constant 15 : index
    %c0_13 = arith.constant 0 : index
    %11 = vector.load %arg0[%c0_12, %c15, %c0_13] : memref<2x48x128xbf16, #tpu.memory_space<vmem>>, vector<2x16x128xbf16>
    %12 = vector.shape_cast %11 : vector<2x16x128xbf16> to vector<32x128xbf16>
    %c0_14 = arith.constant 0 : index
    %c16 = arith.constant 16 : index
    %c0_15 = arith.constant 0 : index
    %13 = vector.load %arg0[%c0_14, %c16, %c0_15] : memref<2x48x128xbf16, #tpu.memory_space<vmem>>, vector<2x16x128xbf16>
    %14 = vector.shape_cast %13 : vector<2x16x128xbf16> to vector<32x128xbf16>
    %15 = tpu.concatenate %12, %14 in 1 : vector<32x128xbf16>, vector<32x128xbf16> -> vector<32x256xbf16>
    %c256 = arith.constant 256 : index
    %c0_16 = arith.constant 0 : index
    %16 = vector.load %arg1[%c256, %c0_16] : memref<896x128xbf16, #tpu.memory_space<vmem>>, vector<256x128xbf16>
    %cst_17 = arith.constant dense<0.000000e+00> : vector<32x128xf32>
    %17 = tpu.matmul %15, %16, %cst_17 {dimension_numbers = #tpu.dot_dimension_numbers<[1], [0], [0], [1], [0, 0, 1, 1], [], []>} : vector<32x256xbf16>, vector<256x128xbf16>, vector<32x128xf32> -> vector<32x128xf32>
    %18 = arith.addf %10, %17 : vector<32x128xf32>
    %c0_18 = arith.constant 0 : index
    %c17 = arith.constant 17 : index
    %c0_19 = arith.constant 0 : index
    %19 = vector.load %arg0[%c0_18, %c17, %c0_19] : memref<2x48x128xbf16, #tpu.memory_space<vmem>>, vector<2x16x128xbf16>
    %20 = vector.shape_cast %19 : vector<2x16x128xbf16> to vector<32x128xbf16>
    %c0_20 = arith.constant 0 : index
    %c18 = arith.constant 18 : index
    %c0_21 = arith.constant 0 : index
    %21 = vector.load %arg0[%c0_20, %c18, %c0_21] : memref<2x48x128xbf16, #tpu.memory_space<vmem>>, vector<2x16x128xbf16>
    %22 = vector.shape_cast %21 : vector<2x16x128xbf16> to vector<32x128xbf16>
    %23 = tpu.concatenate %20, %22 in 1 : vector<32x128xbf16>, vector<32x128xbf16> -> vector<32x256xbf16>
    %c512 = arith.constant 512 : index
    %c0_22 = arith.constant 0 : index
    %24 = vector.load %arg1[%c512, %c0_22] : memref<896x128xbf16, #tpu.memory_space<vmem>>, vector<256x128xbf16>
    %cst_23 = arith.constant dense<0.000000e+00> : vector<32x128xf32>
    %25 = tpu.matmul %23, %24, %cst_23 {dimension_numbers = #tpu.dot_dimension_numbers<[1], [0], [0], [1], [0, 0, 1, 1], [], []>} : vector<32x256xbf16>, vector<256x128xbf16>, vector<32x128xf32> -> vector<32x128xf32>
    %26 = arith.addf %18, %25 : vector<32x128xf32>
    %c0_24 = arith.constant 0 : index
    %c19 = arith.constant 19 : index
    %c0_25 = arith.constant 0 : index
    %27 = vector.load %arg0[%c0_24, %c19, %c0_25] : memref<2x48x128xbf16, #tpu.memory_space<vmem>>, vector<2x16x128xbf16>
    %28 = vector.shape_cast %27 : vector<2x16x128xbf16> to vector<32x128xbf16>
    %c768 = arith.constant 768 : index
    %c0_26 = arith.constant 0 : index
    %29 = vector.load %arg1[%c768, %c0_26] : memref<896x128xbf16, #tpu.memory_space<vmem>>, vector<128x128xbf16>
    %cst_27 = arith.constant dense<0.000000e+00> : vector<32x128xf32>
    %30 = tpu.matmul %28, %29, %cst_27 {dimension_numbers = #tpu.dot_dimension_numbers<[1], [0], [0], [1], [0, 0, 1, 1], [], []>} : vector<32x128xbf16>, vector<128x128xbf16>, vector<32x128xf32> -> vector<32x128xf32>
    %31 = arith.addf %26, %30 : vector<32x128xf32>
    %cst_28 = arith.constant dense<0.000000e+00> : vector<128xf32>
    %32 = vector.multi_reduction <add>, %31, %cst_28 [0] : vector<32x128xf32> to vector<128xf32>
    %33 = vector.shape_cast %32 : vector<128xf32> to vector<1x128xf32>
    %cst_29 = arith.constant 3.125000e-02 : f32
    %34 = vector.broadcast %cst_29 : f32 to vector<1x128xf32>
    %35 = arith.mulf %33, %34 : vector<1x128xf32>
    %36 = vector.broadcast %35 : vector<1x128xf32> to vector<32x128xf32>
    %37 = arith.subf %31, %36 : vector<32x128xf32>
    %38 = arith.mulf %37, %37 : vector<32x128xf32>
    %cst_30 = arith.constant dense<0.000000e+00> : vector<128xf32>
    %39 = vector.multi_reduction <add>, %38, %cst_30 [0] : vector<32x128xf32> to vector<128xf32>
    %40 = vector.shape_cast %39 : vector<128xf32> to vector<1x128xf32>
    %cst_31 = arith.constant 3.125000e-02 : f32
    %41 = vector.broadcast %cst_31 : f32 to vector<1x128xf32>
    %42 = arith.mulf %40, %41 : vector<1x128xf32>
    %c0_32 = arith.constant 0 : index
    %c0_33 = arith.constant 0 : index
    %43 = vector.load %arg2[%c0_32, %c0_33] : memref<1x128xf32, #tpu.memory_space<vmem>>, vector<1x128xf32>
    %cst_34 = arith.constant 9.99999974E-6 : f32
    %44 = vector.broadcast %cst_34 : f32 to vector<1x128xf32>
    %45 = arith.addf %42, %44 : vector<1x128xf32>
    %46 = math.rsqrt %45 : vector<1x128xf32>
    %47 = arith.mulf %43, %46 : vector<1x128xf32>
    %48 = vector.broadcast %47 : vector<1x128xf32> to vector<32x128xf32>
    %49 = arith.mulf %37, %48 : vector<32x128xf32>
    %c0_35 = arith.constant 0 : index
    %c0_36 = arith.constant 0 : index
    %50 = vector.load %arg3[%c0_35, %c0_36] : memref<1x128xf32, #tpu.memory_space<vmem>>, vector<1x128xf32>
    %51 = vector.broadcast %50 : vector<1x128xf32> to vector<32x128xf32>
    %52 = arith.addf %49, %51 : vector<32x128xf32>
    %cst_37 = arith.constant 0.000000e+00 : f32
    %53 = vector.broadcast %cst_37 : f32 to vector<32x128xf32>
    %54 = arith.maximumf %52, %53 : vector<32x128xf32>
    %55 = vector.shape_cast %54 : vector<32x128xf32> to vector<2x16x128xf32>
    %56 = arith.truncf %55 : vector<2x16x128xf32> to vector<2x16x128xbf16>
    %c0_38 = arith.constant 0 : index
    %c16_39 = arith.constant 16 : index
    %c0_40 = arith.constant 0 : index
    %57 = vector.load %arg14[%c0_38, %c16_39, %c0_40] : memref<2x48x128xbf16, #tpu.memory_space<vmem>>, vector<2x16x128xbf16>
    tpu.vector_store %arg14[%c0_38, %c16_39, %c0_40], %56 {strides = array<i32>} : memref<2x48x128xbf16, #tpu.memory_space<vmem>>, vector<2x16x128xbf16>,
    %c0_41 = arith.constant 0 : index
    %c14_42 = arith.constant 14 : index
    %c0_43 = arith.constant 0 : index
    %58 = vector.load %arg14[%c0_41, %c14_42, %c0_43] : memref<2x48x128xbf16, #tpu.memory_space<vmem>>, vector<2x16x128xbf16>
    %59 = vector.shape_cast %58 : vector<2x16x128xbf16> to vector<32x128xbf16>
    %c0_44 = arith.constant 0 : index
    %c15_45 = arith.constant 15 : index
    %c0_46 = arith.constant 0 : index
    %60 = vector.load %arg14[%c0_44, %c15_45, %c0_46] : memref<2x48x128xbf16, #tpu.memory_space<vmem>>, vector<2x16x128xbf16>
    %61 = vector.shape_cast %60 : vector<2x16x128xbf16> to vector<32x128xbf16>
    %62 = tpu.concatenate %59, %61 in 1 : vector<32x128xbf16>, vector<32x128xbf16> -> vector<32x256xbf16>
    %c0_47 = arith.constant 0 : index
    %c0_48 = arith.constant 0 : index
    %63 = vector.load %arg4[%c0_47, %c0_48] : memref<640x128xbf16, #tpu.memory_space<vmem>>, vector<256x128xbf16>
    %cst_49 = arith.constant dense<0.000000e+00> : vector<32x128xf32>
    %64 = tpu.matmul %62, %63, %cst_49 {dimension_numbers = #tpu.dot_dimension_numbers<[1], [0], [0], [1], [0, 0, 1, 1], [], []>} : vector<32x256xbf16>, vector<256x128xbf16>, vector<32x128xf32> -> vector<32x128xf32>
    %c0_50 = arith.constant 0 : index
    %c16_51 = arith.constant 16 : index
    %c0_52 = arith.constant 0 : index
    %65 = vector.load %arg14[%c0_50, %c16_51, %c0_52] : memref<2x48x128xbf16, #tpu.memory_space<vmem>>, vector<2x16x128xbf16>
    %66 = vector.shape_cast %65 : vector<2x16x128xbf16> to vector<32x128xbf16>
    %c0_53 = arith.constant 0 : index
    %c17_54 = arith.constant 17 : index
    %c0_55 = arith.constant 0 : index
    %67 = vector.load %arg14[%c0_53, %c17_54, %c0_55] : memref<2x48x128xbf16, #tpu.memory_space<vmem>>, vector<2x16x128xbf16>
    %68 = vector.shape_cast %67 : vector<2x16x128xbf16> to vector<32x128xbf16>
    %69 = tpu.concatenate %66, %68 in 1 : vector<32x128xbf16>, vector<32x128xbf16> -> vector<32x256xbf16>
    %c256_56 = arith.constant 256 : index
    %c0_57 = arith.constant 0 : index
    %70 = vector.load %arg4[%c256_56, %c0_57] : memref<640x128xbf16, #tpu.memory_space<vmem>>, vector<256x128xbf16>
    %cst_58 = arith.constant dense<0.000000e+00> : vector<32x128xf32>
    %71 = tpu.matmul %69, %70, %cst_58 {dimension_numbers = #tpu.dot_dimension_numbers<[1], [0], [0], [1], [0, 0, 1, 1], [], []>} : vector<32x256xbf16>, vector<256x128xbf16>, vector<32x128xf32> -> vector<32x128xf32>
    %72 = arith.addf %64, %71 : vector<32x128xf32>
    %c0_59 = arith.constant 0 : index
    %c18_60 = arith.constant 18 : index
    %c0_61 = arith.constant 0 : index
    %73 = vector.load %arg14[%c0_59, %c18_60, %c0_61] : memref<2x48x128xbf16, #tpu.memory_space<vmem>>, vector<2x16x128xbf16>
    %74 = vector.shape_cast %73 : vector<2x16x128xbf16> to vector<32x128xbf16>
    %c512_62 = arith.constant 512 : index
    %c0_63 = arith.constant 0 : index
    %75 = vector.load %arg4[%c512_62, %c0_63] : memref<640x128xbf16, #tpu.memory_space<vmem>>, vector<128x128xbf16>
    %cst_64 = arith.constant dense<0.000000e+00> : vector<32x128xf32>
    %76 = tpu.matmul %74, %75, %cst_64 {dimension_numbers = #tpu.dot_dimension_numbers<[1], [0], [0], [1], [0, 0, 1, 1], [], []>} : vector<32x128xbf16>, vector<128x128xbf16>, vector<32x128xf32> -> vector<32x128xf32>
    %77 = arith.addf %72, %76 : vector<32x128xf32>
    %cst_65 = arith.constant dense<0.000000e+00> : vector<128xf32>
    %78 = vector.multi_reduction <add>, %77, %cst_65 [0] : vector<32x128xf32> to vector<128xf32>
    %79 = vector.shape_cast %78 : vector<128xf32> to vector<1x128xf32>
    %cst_66 = arith.constant 3.125000e-02 : f32
    %80 = vector.broadcast %cst_66 : f32 to vector<1x128xf32>
    %81 = arith.mulf %79, %80 : vector<1x128xf32>
    %82 = vector.broadcast %81 : vector<1x128xf32> to vector<32x128xf32>
    %83 = arith.subf %77, %82 : vector<32x128xf32>
    %84 = arith.mulf %83, %83 : vector<32x128xf32>
    %cst_67 = arith.constant dense<0.000000e+00> : vector<128xf32>
    %85 = vector.multi_reduction <add>, %84, %cst_67 [0] : vector<32x128xf32> to vector<128xf32>
    %86 = vector.shape_cast %85 : vector<128xf32> to vector<1x128xf32>
    %cst_68 = arith.constant 3.125000e-02 : f32
    %87 = vector.broadcast %cst_68 : f32 to vector<1x128xf32>
    %88 = arith.mulf %86, %87 : vector<1x128xf32>
    %c0_69 = arith.constant 0 : index
    %c0_70 = arith.constant 0 : index
    %89 = vector.load %arg5[%c0_69, %c0_70] : memref<1x128xf32, #tpu.memory_space<vmem>>, vector<1x128xf32>
    %cst_71 = arith.constant 9.99999974E-6 : f32
    %90 = vector.broadcast %cst_71 : f32 to vector<1x128xf32>
    %91 = arith.addf %88, %90 : vector<1x128xf32>
    %92 = math.rsqrt %91 : vector<1x128xf32>
    %93 = arith.mulf %89, %92 : vector<1x128xf32>
    %94 = vector.broadcast %93 : vector<1x128xf32> to vector<32x128xf32>
    %95 = arith.mulf %83, %94 : vector<32x128xf32>
    %c0_72 = arith.constant 0 : index
    %c0_73 = arith.constant 0 : index
    %96 = vector.load %arg6[%c0_72, %c0_73] : memref<1x128xf32, #tpu.memory_space<vmem>>, vector<1x128xf32>
    %97 = vector.broadcast %96 : vector<1x128xf32> to vector<32x128xf32>
    %98 = arith.addf %95, %97 : vector<32x128xf32>
    %cst_74 = arith.constant 0.000000e+00 : f32
    %99 = vector.broadcast %cst_74 : f32 to vector<32x128xf32>
    %100 = arith.maximumf %98, %99 : vector<32x128xf32>
    %101 = vector.shape_cast %100 : vector<32x128xf32> to vector<2x16x128xf32>
    %102 = arith.truncf %101 : vector<2x16x128xf32> to vector<2x16x128xbf16>
    %c0_75 = arith.constant 0 : index
    %c16_76 = arith.constant 16 : index
    %c0_77 = arith.constant 0 : index
    %103 = vector.load %arg14[%c0_75, %c16_76, %c0_77] : memref<2x48x128xbf16, #tpu.memory_space<vmem>>, vector<2x16x128xbf16>
    tpu.vector_store %arg14[%c0_75, %c16_76, %c0_77], %102 {strides = array<i32>} : memref<2x48x128xbf16, #tpu.memory_space<vmem>>, vector<2x16x128xbf16>,
    %c0_78 = arith.constant 0 : index
    %c15_79 = arith.constant 15 : index
    %c0_80 = arith.constant 0 : index
    %104 = vector.load %arg14[%c0_78, %c15_79, %c0_80] : memref<2x48x128xbf16, #tpu.memory_space<vmem>>, vector<2x16x128xbf16>
    %105 = vector.shape_cast %104 : vector<2x16x128xbf16> to vector<32x128xbf16>
    %c0_81 = arith.constant 0 : index
    %c16_82 = arith.constant 16 : index
    %c0_83 = arith.constant 0 : index
    %106 = vector.load %arg14[%c0_81, %c16_82, %c0_83] : memref<2x48x128xbf16, #tpu.memory_space<vmem>>, vector<2x16x128xbf16>
    %107 = vector.shape_cast %106 : vector<2x16x128xbf16> to vector<32x128xbf16>
    %108 = tpu.concatenate %105, %107 in 1 : vector<32x128xbf16>, vector<32x128xbf16> -> vector<32x256xbf16>
    %c0_84 = arith.constant 0 : index
    %c0_85 = arith.constant 0 : index
    %109 = vector.load %arg7[%c0_84, %c0_85] : memref<384x128xbf16, #tpu.memory_space<vmem>>, vector<256x128xbf16>
    %cst_86 = arith.constant dense<0.000000e+00> : vector<32x128xf32>
    %110 = tpu.matmul %108, %109, %cst_86 {dimension_numbers = #tpu.dot_dimension_numbers<[1], [0], [0], [1], [0, 0, 1, 1], [], []>} : vector<32x256xbf16>, vector<256x128xbf16>, vector<32x128xf32> -> vector<32x128xf32>
    %c0_87 = arith.constant 0 : index
    %c17_88 = arith.constant 17 : index
    %c0_89 = arith.constant 0 : index
    %111 = vector.load %arg14[%c0_87, %c17_88, %c0_89] : memref<2x48x128xbf16, #tpu.memory_space<vmem>>, vector<2x16x128xbf16>
    %112 = vector.shape_cast %111 : vector<2x16x128xbf16> to vector<32x128xbf16>
    %c256_90 = arith.constant 256 : index
    %c0_91 = arith.constant 0 : index
    %113 = vector.load %arg7[%c256_90, %c0_91] : memref<384x128xbf16, #tpu.memory_space<vmem>>, vector<128x128xbf16>
    %cst_92 = arith.constant dense<0.000000e+00> : vector<32x128xf32>
    %114 = tpu.matmul %112, %113, %cst_92 {dimension_numbers = #tpu.dot_dimension_numbers<[1], [0], [0], [1], [0, 0, 1, 1], [], []>} : vector<32x128xbf16>, vector<128x128xbf16>, vector<32x128xf32> -> vector<32x128xf32>
    %115 = arith.addf %110, %114 : vector<32x128xf32>
    %cst_93 = arith.constant dense<0.000000e+00> : vector<128xf32>
    %116 = vector.multi_reduction <add>, %115, %cst_93 [0] : vector<32x128xf32> to vector<128xf32>
    %117 = vector.shape_cast %116 : vector<128xf32> to vector<1x128xf32>
    %cst_94 = arith.constant 3.125000e-02 : f32
    %118 = vector.broadcast %cst_94 : f32 to vector<1x128xf32>
    %119 = arith.mulf %117, %118 : vector<1x128xf32>
    %120 = vector.broadcast %119 : vector<1x128xf32> to vector<32x128xf32>
    %121 = arith.subf %115, %120 : vector<32x128xf32>
    %122 = arith.mulf %121, %121 : vector<32x128xf32>
    %cst_95 = arith.constant dense<0.000000e+00> : vector<128xf32>
    %123 = vector.multi_reduction <add>, %122, %cst_95 [0] : vector<32x128xf32> to vector<128xf32>
    %124 = vector.shape_cast %123 : vector<128xf32> to vector<1x128xf32>
    %cst_96 = arith.constant 3.125000e-02 : f32
    %125 = vector.broadcast %cst_96 : f32 to vector<1x128xf32>
    %126 = arith.mulf %124, %125 : vector<1x128xf32>
    %c0_97 = arith.constant 0 : index
    %c0_98 = arith.constant 0 : index
    %127 = vector.load %arg8[%c0_97, %c0_98] : memref<1x128xf32, #tpu.memory_space<vmem>>, vector<1x128xf32>
    %cst_99 = arith.constant 9.99999974E-6 : f32
    %128 = vector.broadcast %cst_99 : f32 to vector<1x128xf32>
    %129 = arith.addf %126, %128 : vector<1x128xf32>
    %130 = math.rsqrt %129 : vector<1x128xf32>
    %131 = arith.mulf %127, %130 : vector<1x128xf32>
    %132 = vector.broadcast %131 : vector<1x128xf32> to vector<32x128xf32>
    %133 = arith.mulf %121, %132 : vector<32x128xf32>
    %c0_100 = arith.constant 0 : index
    %c0_101 = arith.constant 0 : index
    %134 = vector.load %arg9[%c0_100, %c0_101] : memref<1x128xf32, #tpu.memory_space<vmem>>, vector<1x128xf32>
    %135 = vector.broadcast %134 : vector<1x128xf32> to vector<32x128xf32>
    %136 = arith.addf %133, %135 : vector<32x128xf32>
    %137 = vector.shape_cast %136 : vector<32x128xf32> to vector<2x16x128xf32>
    %c0_102 = arith.constant 0 : index
    %c0_103 = arith.constant 0 : index
    %c0_104 = arith.constant 0 : index
    %138 = vector.load %arg13[%c0_102, %c0_103, %c0_104] : memref<2x16x128xf32, #tpu.memory_space<vmem>>, vector<2x16x128xf32>
    tpu.vector_store %arg13[%c0_102, %c0_103, %c0_104], %137 {strides = array<i32>} : memref<2x16x128xf32, #tpu.memory_space<vmem>>, vector<2x16x128xf32>,
    %c0_105 = arith.constant 0 : index
    %c16_106 = arith.constant 16 : index
    %c0_107 = arith.constant 0 : index
    %139 = vector.load %arg0[%c0_105, %c16_106, %c0_107] : memref<2x48x128xbf16, #tpu.memory_space<vmem>>, vector<2x16x128xbf16>
    %140 = vector.shape_cast %139 : vector<2x16x128xbf16> to vector<32x128xbf16>
    %c0_108 = arith.constant 0 : index
    %c0_109 = arith.constant 0 : index
    %141 = vector.load %arg10[%c0_108, %c0_109] : memref<128x128xbf16, #tpu.memory_space<vmem>>, vector<128x128xbf16>
    %cst_110 = arith.constant dense<0.000000e+00> : vector<32x128xf32>
    %142 = tpu.matmul %140, %141, %cst_110 {dimension_numbers = #tpu.dot_dimension_numbers<[1], [0], [0], [1], [0, 0, 1, 1], [], []>} : vector<32x128xbf16>, vector<128x128xbf16>, vector<32x128xf32> -> vector<32x128xf32>
    %cst_111 = arith.constant dense<0.000000e+00> : vector<128xf32>
    %143 = vector.multi_reduction <add>, %142, %cst_111 [0] : vector<32x128xf32> to vector<128xf32>
    %144 = vector.shape_cast %143 : vector<128xf32> to vector<1x128xf32>
    %cst_112 = arith.constant 3.125000e-02 : f32
    %145 = vector.broadcast %cst_112 : f32 to vector<1x128xf32>
    %146 = arith.mulf %144, %145 : vector<1x128xf32>
    %147 = vector.broadcast %146 : vector<1x128xf32> to vector<32x128xf32>
    %148 = arith.subf %142, %147 : vector<32x128xf32>
    %149 = arith.mulf %148, %148 : vector<32x128xf32>
    %cst_113 = arith.constant dense<0.000000e+00> : vector<128xf32>
    %150 = vector.multi_reduction <add>, %149, %cst_113 [0] : vector<32x128xf32> to vector<128xf32>
    %151 = vector.shape_cast %150 : vector<128xf32> to vector<1x128xf32>
    %cst_114 = arith.constant 3.125000e-02 : f32
    %152 = vector.broadcast %cst_114 : f32 to vector<1x128xf32>
    %153 = arith.mulf %151, %152 : vector<1x128xf32>
    %c0_115 = arith.constant 0 : index
    %c0_116 = arith.constant 0 : index
    %154 = vector.load %arg11[%c0_115, %c0_116] : memref<1x128xf32, #tpu.memory_space<vmem>>, vector<1x128xf32>
    %cst_117 = arith.constant 9.99999974E-6 : f32
    %155 = vector.broadcast %cst_117 : f32 to vector<1x128xf32>
    %156 = arith.addf %153, %155 : vector<1x128xf32>
    %157 = math.rsqrt %156 : vector<1x128xf32>
    %158 = arith.mulf %154, %157 : vector<1x128xf32>
    %159 = vector.broadcast %158 : vector<1x128xf32> to vector<32x128xf32>
    %160 = arith.mulf %148, %159 : vector<32x128xf32>
    %c0_118 = arith.constant 0 : index
    %c0_119 = arith.constant 0 : index
    %161 = vector.load %arg12[%c0_118, %c0_119] : memref<1x128xf32, #tpu.memory_space<vmem>>, vector<1x128xf32>
    %162 = vector.broadcast %161 : vector<1x128xf32> to vector<32x128xf32>
    %163 = arith.addf %160, %162 : vector<32x128xf32>
    %c0_120 = arith.constant 0 : index
    %c0_121 = arith.constant 0 : index
    %c0_122 = arith.constant 0 : index
    %164 = vector.load %arg13[%c0_120, %c0_121, %c0_122] : memref<2x16x128xf32, #tpu.memory_space<vmem>>, vector<2x16x128xf32>
    %165 = vector.shape_cast %163 : vector<32x128xf32> to vector<2x16x128xf32>
    %166 = arith.addf %164, %165 : vector<2x16x128xf32>
    %cst_123 = arith.constant 0.000000e+00 : f32
    %167 = vector.broadcast %cst_123 : f32 to vector<2x16x128xf32>
    %168 = arith.maximumf %166, %167 : vector<2x16x128xf32>
    %c0_124 = arith.constant 0 : index
    %c0_125 = arith.constant 0 : index
    %c0_126 = arith.constant 0 : index
    %169 = vector.load %arg13[%c0_124, %c0_125, %c0_126] : memref<2x16x128xf32, #tpu.memory_space<vmem>>, vector<2x16x128xf32>
    tpu.vector_store %arg13[%c0_124, %c0_125, %c0_126], %168 {strides = array<i32>} : memref<2x16x128xf32, #tpu.memory_space<vmem>>, vector<2x16x128xf32>,
    return
  }
}

</mosaic_0001>

<llo_original>
// kernel: residual_block.1
$region0: #{residual_block.1}
  #allocation0 [shape = 'u32[]', space=smem, size = 0x4, offset = 0x4, fixed_abs, tag = 'smem constant byte address 0x4 - core index']
  #allocation1 [shape = 'u32[144,128]{1,0:T(1,128)}', space=vmem, size = 0x12000, scoped, tag = 'internal scratch']
  #allocation2 [shape = 'bf16[2,48,128]{2,1,0:T(8,128)(2,1)}', space=vmem, size = 0x6000, scoped, tag = 'scratch operand']
  %s0 = inlined_call_operand.vmem [shape: bf16[2,48,128], index: 0, kind: input, shape index: {}]
  %s1 = inlined_call_operand.vmem [shape: bf16[896,128], index: 1, kind: input, shape index: {}]
  %s2 = inlined_call_operand.vmem [shape: f32[1,128], index: 2, kind: input, shape index: {}]
  %s3 = inlined_call_operand.vmem [shape: f32[1,128], index: 3, kind: input, shape index: {}]
  %s4 = inlined_call_operand.vmem [shape: bf16[640,128], index: 4, kind: input, shape index: {}]
  %s5 = inlined_call_operand.vmem [shape: f32[1,128], index: 5, kind: input, shape index: {}]
  %s6 = inlined_call_operand.vmem [shape: f32[1,128], index: 6, kind: input, shape index: {}]
  %s7 = inlined_call_operand.vmem [shape: bf16[384,128], index: 7, kind: input, shape index: {}]
  %s8 = inlined_call_operand.vmem [shape: f32[1,128], index: 8, kind: input, shape index: {}]
  %s9 = inlined_call_operand.vmem [shape: f32[1,128], index: 9, kind: input, shape index: {}]
  %s10 = inlined_call_operand.vmem [shape: bf16[128,128], index: 10, kind: input, shape index: {}]
  %s11 = inlined_call_operand.vmem [shape: f32[1,128], index: 11, kind: input, shape index: {}]
  %s12 = inlined_call_operand.vmem [shape: f32[1,128], index: 12, kind: input, shape index: {}]
  %s13 = inlined_call_operand.vmem [shape: f32[2,16,128], index: 13, kind: output, shape index: {}]
  %s14 = sld [smem:[#allocation0]]
  $region62: #{residual_block.1} parent=0
    _
  %s16 = ssub.s32 1, %s14
  %s17 = scalar_select 0, %s16, %s14
  // Predicated region
  $region2: #{residual_block.1} parent=0 // pred_check
    _
  $region3: #{residual_block.1} parent=0 // pred_check_branch
    %19 = sbr.rel (0) target = $region5
  $region4: #{residual_block.1} parent=0 // pred_region
    _
  $region5: #{residual_block.1} parent=0 // pred_fallthru
    _
  // Predicated region
  $region6: #{residual_block.1} parent=0 // pred_check
    _
  $region7: #{residual_block.1} parent=0 // pred_check_branch
    %21 = sbr.rel (0) target = $region9
  $region8: #{residual_block.1} parent=0 // pred_region
    _
  $region9: #{residual_block.1} parent=0 // pred_fallthru
    _
  // Predicated region
  $region10: #{residual_block.1} parent=0 // pred_check
    _
  $region11: #{residual_block.1} parent=0 // pred_check_branch
    %23 = sbr.rel (0) target = $region13
  $region12: #{residual_block.1} parent=0 // pred_region
    _
  $region13: #{residual_block.1} parent=0 // pred_fallthru
    _
  // Predicated region
  $region14: #{residual_block.1} parent=0 // pred_check
    _
  $region15: #{residual_block.1} parent=0 // pred_check_branch
    %25 = sbr.rel (0) target = $region17
  $region16: #{residual_block.1} parent=0 // pred_region
    _
  $region17: #{residual_block.1} parent=0 // pred_fallthru
    _
  // Predicated region
  $region18: #{residual_block.1} parent=0 // pred_check
    _
  $region19: #{residual_block.1} parent=0 // pred_check_branch
    %27 = sbr.rel (0) target = $region21
  $region20: #{residual_block.1} parent=0 // pred_region
    _
  $region21: #{residual_block.1} parent=0 // pred_fallthru
    _
  // Predicated region
  $region22: #{residual_block.1} parent=0 // pred_check
    _
  $region23: #{residual_block.1} parent=0 // pred_check_branch
    %29 = sbr.rel (0) target = $region25
  $region24: #{residual_block.1} parent=0 // pred_region
    _
  $region25: #{residual_block.1} parent=0 // pred_fallthru
    _
  // Predicated region
  $region26: #{residual_block.1} parent=0 // pred_check
    _
  $region27: #{residual_block.1} parent=0 // pred_check_branch
    %31 = sbr.rel (0) target = $region29
  $region28: #{residual_block.1} parent=0 // pred_region
    _
  $region29: #{residual_block.1} parent=0 // pred_fallthru
    _
  // Predicated region
  $region30: #{residual_block.1} parent=0 // pred_check
    _
  $region31: #{residual_block.1} parent=0 // pred_check_branch
    %33 = sbr.rel (0) target = $region33
  $region32: #{residual_block.1} parent=0 // pred_region
    _
  $region33: #{residual_block.1} parent=0 // pred_fallthru
    _
  // Predicated region
  $region34: #{residual_block.1} parent=0 // pred_check
    _
  $region35: #{residual_block.1} parent=0 // pred_check_branch
    %35 = sbr.rel (0) target = $region37
  $region36: #{residual_block.1} parent=0 // pred_region
    _
  $region37: #{residual_block.1} parent=0 // pred_fallthru
    _
  // Predicated region
  $region38: #{residual_block.1} parent=0 // pred_check
    _
  $region39: #{residual_block.1} parent=0 // pred_check_branch
    %37 = sbr.rel (0) target = $region41
  $region40: #{residual_block.1} parent=0 // pred_region
    _
  $region41: #{residual_block.1} parent=0 // pred_fallthru
    _
  // Predicated region
  $region42: #{residual_block.1} parent=0 // pred_check
    _
  $region43: #{residual_block.1} parent=0 // pred_check_branch
    %39 = sbr.rel (0) target = $region45
  $region44: #{residual_block.1} parent=0 // pred_region
    _
  $region45: #{residual_block.1} parent=0 // pred_fallthru
    _
  // Predicated region
  $region46: #{residual_block.1} parent=0 // pred_check
    _
  $region47: #{residual_block.1} parent=0 // pred_check_branch
    %41 = sbr.rel (0) target = $region49
  $region48: #{residual_block.1} parent=0 // pred_region
    _
  $region49: #{residual_block.1} parent=0 // pred_fallthru
    _
  // Predicated region
  $region50: #{residual_block.1} parent=0 // pred_check
    _
  $region51: #{residual_block.1} parent=0 // pred_check_branch
    %43 = sbr.rel (0) target = $region53
  $region52: #{residual_block.1} parent=0 // pred_region
    _
  $region53: #{residual_block.1} parent=0 // pred_fallthru
    _
  %45 = vst [vmem:[#allocation2] sm:$0xf] 0
  %46 = vst [vmem:[#allocation2 + $0x4] sm:$0xf] 0
  %47 = vst [vmem:[#allocation2 + $0x18] sm:$0xf] 0
  %48 = vst [vmem:[#allocation2 + $0x1c] sm:$0xf] 0
  %49 = vst [vmem:[#allocation2 + $0x10] sm:$0xf] 0
  %50 = vst [vmem:[#allocation2 + $0x14] sm:$0xf] 0
  %51 = vst [vmem:[#allocation2 + $0x28] sm:$0xf] 0
  %52 = vst [vmem:[#allocation2 + $0x2c] sm:$0xf] 0
  %v53 = vld [vmem:[%s0 + $0x4] sm:$0xc]
  %v54 = vld [vmem:[%s0 + $0x8] sm:$0xf]
  %v55 = vld [vmem:[%s0 + $0xc] sm:$0x7]
  %v56 = vld [vmem:[%s0 + $0x1c] sm:$0xc]
  %v57 = vld [vmem:[%s0 + $0x20] sm:$0xf]
  %v58 = vld [vmem:[%s0 + $0x24] sm:$0x7]
  %vm59 = vsmask.f32 1280
  %vm60 = vsmask.f32 5392
  %vm61 = vmor %vm59, %vm60
  %v63 = vshrl.u32 %v53, 16
  %v65 = vrot.slane %v63, 6
  %v66 = vshll.u32 %v53, 16
  %v68 = vrot.slane %v66, 7
  %v69 = vor.u32 %v65, %v68
  %v70 = vrot.slane %v69, 4
  %v72 = vshrl.u32 %v54, 16
  %v74 = vrot.slane %v72, 6
  %v75 = vshll.u32 %v54, 16
  %v77 = vrot.slane %v75, 7
  %v78 = vor.u32 %v74, %v77
  %v79 = vsel %vm61, %v70, %v78
  %v80 = vrot.slane %v78, 4
  %v82 = vshrl.u32 %v55, 16
  %v84 = vrot.slane %v82, 6
  %v85 = vshll.u32 %v55, 16
  %v87 = vrot.slane %v85, 7
  %v88 = vor.u32 %v84, %v87
  %v89 = vsel %vm61, %v80, %v88
  %v91 = vshrl.u32 %v56, 16
  %v93 = vrot.slane %v91, 6
  %v94 = vshll.u32 %v56, 16
  %v96 = vrot.slane %v94, 7
  %v97 = vor.u32 %v93, %v96
  %v98 = vrot.slane %v97, 4
  %v100 = vshrl.u32 %v57, 16
  %v102 = vrot.slane %v100, 6
  %v103 = vshll.u32 %v57, 16
  %v105 = vrot.slane %v103, 7
  %v106 = vor.u32 %v102, %v105
  %v107 = vsel %vm61, %v98, %v106
  %v108 = vrot.slane %v106, 4
  %v110 = vshrl.u32 %v58, 16
  %v112 = vrot.slane %v110, 6
  %v113 = vshll.u32 %v58, 16
  %v115 = vrot.slane %v113, 7
  %v116 = vor.u32 %v112, %v115
  %v117 = vsel %vm61, %v108, %v116
  %v118 = vld [vmem:[%s0 + $0x4] sm:$0x8]
  %v119 = vld [vmem:[%s0 + $0x1c] sm:$0x8]
  %vm126 = vcmask 1040384
  %vm127 = vcmask 1044484
  %vm128 = vmor %vm126, %vm127
  %v129 = vrot.slane %v118, 7
  %v130 = vrot.slane %v129, 4
  %v131 = vrot.slane %v54, 7
  %v132 = vsel %vm128, %v130, %v131
  %v133 = vrot.slane %v131, 4
  %v134 = vrot.slane %v55, 7
  %v135 = vsel %vm128, %v133, %v134
  %v136 = vrot.slane %v119, 7
  %v137 = vrot.slane %v136, 4
  %v138 = vrot.slane %v57, 7
  %v139 = vsel %vm128, %v137, %v138
  %v140 = vrot.slane %v138, 4
  %v141 = vrot.slane %v58, 7
  %v142 = vsel %vm128, %v140, %v141
  %v143 = vunpack.c.l.b16 %v79
  %v144 = vunpack.c.l.b16 %v89
  %v145 = vunpack.c.l.b16 %v107
  %v146 = vunpack.c.l.b16 %v117
  %v147 = vpack.c.b16 %v144, %v143
  %v148 = vpack.c.b16 %v146, %v145
  %v151 = vunpack.c.l.b16 %v132
  %v152 = vunpack.c.l.b16 %v135
  %v153 = vunpack.c.l.b16 %v139
  %v154 = vunpack.c.l.b16 %v142
  %v155 = vpack.c.b16 %v152, %v151
  %v156 = vpack.c.b16 %v154, %v153
  %v159 = vld [vmem:[%s1] sm:$0xf]
  %v160 = vld [vmem:[%s1 + $0x4] sm:$0xf]
  %v161 = vld [vmem:[%s1 + $0x8] sm:$0xf]
  %v162 = vld [vmem:[%s1 + $0xc] sm:$0xf]
  %v163 = vld [vmem:[%s1 + $0x10] sm:$0xf]
  %v164 = vld [vmem:[%s1 + $0x14] sm:$0xf]
  %v165 = vld [vmem:[%s1 + $0x18] sm:$0xf]
  %v166 = vld [vmem:[%s1 + $0x1c] sm:$0xf]
  %v167 = vld [vmem:[%s1 + $0x20] sm:$0xf]
  %v168 = vld [vmem:[%s1 + $0x24] sm:$0xf]
  %v169 = vld [vmem:[%s1 + $0x28] sm:$0xf]
  %v170 = vld [vmem:[%s1 + $0x2c] sm:$0xf]
  %v171 = vld [vmem:[%s1 + $0x30] sm:$0xf]
  %v172 = vld [vmem:[%s1 + $0x34] sm:$0xf]
  %v173 = vld [vmem:[%s1 + $0x38] sm:$0xf]
  %v174 = vld [vmem:[%s1 + $0x3c] sm:$0xf]
  %v175 = vld [vmem:[%s1 + $0x40] sm:$0xf]
  %v176 = vld [vmem:[%s1 + $0x44] sm:$0xf]
  %v177 = vld [vmem:[%s1 + $0x48] sm:$0xf]
  %v178 = vld [vmem:[%s1 + $0x4c] sm:$0xf]
  %v179 = vld [vmem:[%s1 + $0x50] sm:$0xf]
  %v180 = vld [vmem:[%s1 + $0x54] sm:$0xf]
  %v181 = vld [vmem:[%s1 + $0x58] sm:$0xf]
  %v182 = vld [vmem:[%s1 + $0x5c] sm:$0xf]
  %v183 = vld [vmem:[%s1 + $0x60] sm:$0xf]
  %v184 = vld [vmem:[%s1 + $0x64] sm:$0xf]
  %v185 = vld [vmem:[%s1 + $0x68] sm:$0xf]
  %v186 = vld [vmem:[%s1 + $0x6c] sm:$0xf]
  %v187 = vld [vmem:[%s1 + $0x70] sm:$0xf]
  %v188 = vld [vmem:[%s1 + $0x74] sm:$0xf]
  %v189 = vld [vmem:[%s1 + $0x78] sm:$0xf]
  %v190 = vld [vmem:[%s1 + $0x7c] sm:$0xf]
  %v191 = vld [vmem:[%s0 + $0xc] sm:$0xf]
  %v192 = vld [vmem:[%s0 + $0x24] sm:$0xf]
  %vm193 = vsmask.f32 256
  %vm194 = vsmask.f32 4368
  %vm195 = vmor %vm193, %vm194
  %v197 = vshrl.u32 %v118, 16
  %v199 = vrot.slane %v197, 7
  %v200 = vrot.slane %v199, 4
  %v201 = vrot.slane %v72, 7
  %v202 = vor.u32 %v201, %v75
  %v203 = vsel %vm195, %v200, %v202
  %v204 = vrot.slane %v201, 4
  %v206 = vshrl.u32 %v191, 16
  %v208 = vrot.slane %v206, 7
  %v209 = vshll.u32 %v191, 16
  %v211 = vor.u32 %v208, %v209
  %v212 = vsel %vm195, %v204, %v211
  %v214 = vshrl.u32 %v119, 16
  %v216 = vrot.slane %v214, 7
  %v217 = vrot.slane %v216, 4
  %v218 = vrot.slane %v100, 7
  %v219 = vor.u32 %v218, %v103
  %v220 = vsel %vm195, %v217, %v219
  %v221 = vrot.slane %v218, 4
  %v223 = vshrl.u32 %v192, 16
  %v225 = vrot.slane %v223, 7
  %v226 = vshll.u32 %v192, 16
  %v228 = vor.u32 %v225, %v226
  %v229 = vsel %vm195, %v221, %v228
  %v230 = vunpack.c.l.b16 %v203
  %v231 = vunpack.c.l.b16 %v212
  %v232 = vunpack.c.l.b16 %v220
  %v233 = vunpack.c.l.b16 %v229
  %v234 = vpack.c.b16 %v231, %v230
  %v235 = vpack.c.b16 %v233, %v232
  %v240 = vunpack.c.l.b16 %v54
  %v241 = vunpack.c.l.b16 %v191
  %v242 = vunpack.c.l.b16 %v57
  %v243 = vunpack.c.l.b16 %v192
  %v244 = vpack.c.b16 %v241, %v240
  %v245 = vpack.c.b16 %v243, %v242
  %v248 = vld [vmem:[%s1 + $0x80] sm:$0xf]
  %v249 = vld [vmem:[%s1 + $0x84] sm:$0xf]
  %v250 = vld [vmem:[%s1 + $0x88] sm:$0xf]
  %v251 = vld [vmem:[%s1 + $0x8c] sm:$0xf]
  %v252 = vld [vmem:[%s1 + $0x90] sm:$0xf]
  %v253 = vld [vmem:[%s1 + $0x94] sm:$0xf]
  %v254 = vld [vmem:[%s1 + $0x98] sm:$0xf]
  %v255 = vld [vmem:[%s1 + $0x9c] sm:$0xf]
  %v256 = vld [vmem:[%s1 + $0xa0] sm:$0xf]
  %v257 = vld [vmem:[%s1 + $0xa4] sm:$0xf]
  %v258 = vld [vmem:[%s1 + $0xa8] sm:$0xf]
  %v259 = vld [vmem:[%s1 + $0xac] sm:$0xf]
  %v260 = vld [vmem:[%s1 + $0xb0] sm:$0xf]
  %v261 = vld [vmem:[%s1 + $0xb4] sm:$0xf]
  %v262 = vld [vmem:[%s1 + $0xb8] sm:$0xf]
  %v263 = vld [vmem:[%s1 + $0xbc] sm:$0xf]
  %v264 = vld [vmem:[%s1 + $0xc0] sm:$0xf]
  %v265 = vld [vmem:[%s1 + $0xc4] sm:$0xf]
  %v266 = vld [vmem:[%s1 + $0xc8] sm:$0xf]
  %v267 = vld [vmem:[%s1 + $0xcc] sm:$0xf]
  %v268 = vld [vmem:[%s1 + $0xd0] sm:$0xf]
  %v269 = vld [vmem:[%s1 + $0xd4] sm:$0xf]
  %v270 = vld [vmem:[%s1 + $0xd8] sm:$0xf]
  %v271 = vld [vmem:[%s1 + $0xdc] sm:$0xf]
  %v272 = vld [vmem:[%s1 + $0xe0] sm:$0xf]
  %v273 = vld [vmem:[%s1 + $0xe4] sm:$0xf]
  %v274 = vld [vmem:[%s1 + $0xe8] sm:$0xf]
  %v275 = vld [vmem:[%s1 + $0xec] sm:$0xf]
  %v276 = vld [vmem:[%s1 + $0xf0] sm:$0xf]
  %v277 = vld [vmem:[%s1 + $0xf4] sm:$0xf]
  %v278 = vld [vmem:[%s1 + $0xf8] sm:$0xf]
  %v279 = vld [vmem:[%s1 + $0xfc] sm:$0xf]
  %v312 = vunpack.c.l.b16 %v248
  %v313 = vunpack.c.l.b16 %v249
  %v314 = vunpack.c.l.b16 %v250
  %v315 = vunpack.c.l.b16 %v251
  %v316 = vunpack.c.l.b16 %v252
  %v317 = vunpack.c.l.b16 %v253
  %v318 = vunpack.c.l.b16 %v254
  %v319 = vunpack.c.l.b16 %v255
  %v320 = vunpack.c.l.b16 %v256
  %v321 = vunpack.c.l.b16 %v257
  %v322 = vunpack.c.l.b16 %v258
  %v323 = vunpack.c.l.b16 %v259
  %v324 = vunpack.c.l.b16 %v260
  %v325 = vunpack.c.l.b16 %v261
  %v326 = vunpack.c.l.b16 %v262
  %v327 = vunpack.c.l.b16 %v263
  %v328 = vunpack.c.l.b16 %v264
  %v329 = vunpack.c.l.b16 %v265
  %v330 = vunpack.c.l.b16 %v266
  %v331 = vunpack.c.l.b16 %v267
  %v332 = vunpack.c.l.b16 %v268
  %v333 = vunpack.c.l.b16 %v269
  %v334 = vunpack.c.l.b16 %v270
  %v335 = vunpack.c.l.b16 %v271
  %v336 = vunpack.c.l.b16 %v272
  %v337 = vunpack.c.l.b16 %v273
  %v338 = vunpack.c.l.b16 %v274
  %v339 = vunpack.c.l.b16 %v275
  %v340 = vunpack.c.l.b16 %v276
  %v341 = vunpack.c.l.b16 %v277
  %v342 = vunpack.c.l.b16 %v278
  %v343 = vunpack.c.l.b16 %v279
  %v344 = vpack.c.b16 %v313, %v312
  %v345 = vpack.c.b16 %v315, %v314
  %v346 = vpack.c.b16 %v317, %v316
  %v347 = vpack.c.b16 %v319, %v318
  %v348 = vpack.c.b16 %v321, %v320
  %v349 = vpack.c.b16 %v323, %v322
  %v350 = vpack.c.b16 %v325, %v324
  %v351 = vpack.c.b16 %v327, %v326
  %v352 = vpack.c.b16 %v329, %v328
  %v353 = vpack.c.b16 %v331, %v330
  %v354 = vpack.c.b16 %v333, %v332
  %v355 = vpack.c.b16 %v335, %v334
  %v356 = vpack.c.b16 %v337, %v336
  %v357 = vpack.c.b16 %v339, %v338
  %v358 = vpack.c.b16 %v341, %v340
  %v359 = vpack.c.b16 %v343, %v342
  %376 = vmatprep.subr.bf16.mxu0 0
  %377 = vmatpush1.bf16.msra.mxu0 %v351
  %378 = vmatprep.subr.bf16.mxu0 0
  %379 = vmatpush1.bf16.msra.mxu0 %v350
  %380 = vmatprep.subr.bf16.mxu0 0
  %381 = vmatpush1.bf16.msra.mxu0 %v349
  %382 = vmatprep.subr.bf16.mxu0 0
  %383 = vmatpush1.bf16.msra.mxu0 %v348
  %384 = vmatprep.subr.bf16.mxu0 0
  %385 = vmatpush1.bf16.msra.mxu0 %v347
  %386 = vmatprep.subr.bf16.mxu0 0
  %387 = vmatpush1.bf16.msra.mxu0 %v346
  %388 = vmatprep.subr.bf16.mxu0 0
  %389 = vmatpush1.bf16.msra.mxu0 %v345
  %390 = vmatprep.subr.bf16.mxu0 0
  %391 = vmatpush1.bf16.msra.mxu0 %v344
  %392 = vmatprep.subr.bf16.mxu0 0
  %393 = vmatpush2.bf16.msra.mxu0 %v359
  %394 = vmatprep.subr.bf16.mxu0 0
  %395 = vmatpush2.bf16.msra.mxu0 %v358
  %396 = vmatprep.subr.bf16.mxu0 0
  %397 = vmatpush2.bf16.msra.mxu0 %v357
  %398 = vmatprep.subr.bf16.mxu0 0
  %399 = vmatpush2.bf16.msra.mxu0 %v356
  %400 = vmatprep.subr.bf16.mxu0 0
  %401 = vmatpush2.bf16.msra.mxu0 %v355
  %402 = vmatprep.subr.bf16.mxu0 0
  %403 = vmatpush2.bf16.msra.mxu0 %v354
  %404 = vmatprep.subr.bf16.mxu0 0
  %405 = vmatpush2.bf16.msra.mxu0 %v353
  %406 = vmatprep.subr.bf16.mxu0 0
  %407 = vmatpush2.bf16.msra.mxu0 %v352
  %408 = vmatprep.mubr.bf16.mxu0 %v244
  %409 = vmatmul.mubr.bf16.gmra.mxu0 %v234
  %v410 = vpop.f32.mrf.mxu0
  %v411 = vadd.f32 0.0, %v410
  %v412 = vpop.f32.mrf.mxu0
  %v413 = vpop.f32.mrf.mxu0
  %v414 = vadd.f32 0.0, %v413
  %v415 = vpop.f32.mrf.mxu0
  %416 = vmatprep.mubr.bf16.mxu0 %v245
  %417 = vmatmul.mubr.bf16.gmra.mxu0 %v235
  %v418 = vpop.f32.mrf.mxu0
  %v419 = vadd.f32 0.0, %v418
  %v420 = vpop.f32.mrf.mxu0
  %v421 = vpop.f32.mrf.mxu0
  %v422 = vadd.f32 0.0, %v421
  %v423 = vpop.f32.mrf.mxu0
  %424 = vdwg.mxu0
  %v457 = vunpack.c.l.b16 %v159
  %v458 = vunpack.c.l.b16 %v160
  %v459 = vunpack.c.l.b16 %v161
  %v460 = vunpack.c.l.b16 %v162
  %v461 = vunpack.c.l.b16 %v163
  %v462 = vunpack.c.l.b16 %v164
  %v463 = vunpack.c.l.b16 %v165
  %v464 = vunpack.c.l.b16 %v166
  %v465 = vunpack.c.l.b16 %v167
  %v466 = vunpack.c.l.b16 %v168
  %v467 = vunpack.c.l.b16 %v169
  %v468 = vunpack.c.l.b16 %v170
  %v469 = vunpack.c.l.b16 %v171
  %v470 = vunpack.c.l.b16 %v172
  %v471 = vunpack.c.l.b16 %v173
  %v472 = vunpack.c.l.b16 %v174
  %v473 = vunpack.c.l.b16 %v175
  %v474 = vunpack.c.l.b16 %v176
  %v475 = vunpack.c.l.b16 %v177
  %v476 = vunpack.c.l.b16 %v178
  %v477 = vunpack.c.l.b16 %v179
  %v478 = vunpack.c.l.b16 %v180
  %v479 = vunpack.c.l.b16 %v181
  %v480 = vunpack.c.l.b16 %v182
  %v481 = vunpack.c.l.b16 %v183
  %v482 = vunpack.c.l.b16 %v184
  %v483 = vunpack.c.l.b16 %v185
  %v484 = vunpack.c.l.b16 %v186
  %v485 = vunpack.c.l.b16 %v187
  %v486 = vunpack.c.l.b16 %v188
  %v487 = vunpack.c.l.b16 %v189
  %v488 = vunpack.c.l.b16 %v190
  %v489 = vpack.c.b16 %v458, %v457
  %v490 = vpack.c.b16 %v460, %v459
  %v491 = vpack.c.b16 %v462, %v461
  %v492 = vpack.c.b16 %v464, %v463
  %v493 = vpack.c.b16 %v466, %v465
  %v494 = vpack.c.b16 %v468, %v467
  %v495 = vpack.c.b16 %v470, %v469
  %v496 = vpack.c.b16 %v472, %v471
  %v497 = vpack.c.b16 %v474, %v473
  %v498 = vpack.c.b16 %v476, %v475
  %v499 = vpack.c.b16 %v478, %v477
  %v500 = vpack.c.b16 %v480, %v479
  %v501 = vpack.c.b16 %v482, %v481
  %v502 = vpack.c.b16 %v484, %v483
  %v503 = vpack.c.b16 %v486, %v485
  %v504 = vpack.c.b16 %v488, %v487
  %521 = vmatprep.subr.bf16.mxu0 0
  %522 = vmatpush1.bf16.msra.mxu0 %v496
  %523 = vmatprep.subr.bf16.mxu0 0
  %524 = vmatpush1.bf16.msra.mxu0 %v495
  %525 = vmatprep.subr.bf16.mxu0 0
  %526 = vmatpush1.bf16.msra.mxu0 %v494
  %527 = vmatprep.subr.bf16.mxu0 0
  %528 = vmatpush1.bf16.msra.mxu0 %v493
  %529 = vmatprep.subr.bf16.mxu0 0
  %530 = vmatpush1.bf16.msra.mxu0 %v492
  %531 = vmatprep.subr.bf16.mxu0 0
  %532 = vmatpush1.bf16.msra.mxu0 %v491
  %533 = vmatprep.subr.bf16.mxu0 0
  %534 = vmatpush1.bf16.msra.mxu0 %v490
  %535 = vmatprep.subr.bf16.mxu0 0
  %536 = vmatpush1.bf16.msra.mxu0 %v489
  %537 = vmatprep.subr.bf16.mxu0 0
  %538 = vmatpush2.bf16.msra.mxu0 %v504
  %539 = vmatprep.subr.bf16.mxu0 0
  %540 = vmatpush2.bf16.msra.mxu0 %v503
  %541 = vmatprep.subr.bf16.mxu0 0
  %542 = vmatpush2.bf16.msra.mxu0 %v502
  %543 = vmatprep.subr.bf16.mxu0 0
  %544 = vmatpush2.bf16.msra.mxu0 %v501
  %545 = vmatprep.subr.bf16.mxu0 0
  %546 = vmatpush2.bf16.msra.mxu0 %v500
  %547 = vmatprep.subr.bf16.mxu0 0
  %548 = vmatpush2.bf16.msra.mxu0 %v499
  %549 = vmatprep.subr.bf16.mxu0 0
  %550 = vmatpush2.bf16.msra.mxu0 %v498
  %551 = vmatprep.subr.bf16.mxu0 0
  %552 = vmatpush2.bf16.msra.mxu0 %v497
  %553 = vmatprep.mubr.bf16.mxu0 %v155
  %554 = vmatmul.mubr.bf16.gmra.mxu0 %v147
  %v555 = vpop.f32.mrf.mxu0
  %v556 = vadd.f32 %v411, %v555
  %v557 = vpop.f32.mrf.mxu0
  %v558 = vpop.f32.mrf.mxu0
  %v559 = vadd.f32 %v414, %v558
  %v560 = vpop.f32.mrf.mxu0
  %561 = vmatprep.mubr.bf16.mxu0 %v156
  %562 = vmatmul.mubr.bf16.gmra.mxu0 %v148
  %v563 = vpop.f32.mrf.mxu0
  %v564 = vadd.f32 %v419, %v563
  %v565 = vpop.f32.mrf.mxu0
  %v566 = vpop.f32.mrf.mxu0
  %v567 = vadd.f32 %v422, %v566
  %v568 = vpop.f32.mrf.mxu0
  %569 = vdwg.mxu0
  %v570 = vld [vmem:[%s0 + $0x8] sm:$0xf]
  %v571 = vld [vmem:[%s0 + $0xc] sm:$0xf]
  %v572 = vld [vmem:[%s0 + $0x10] sm:$0x1]
  %v573 = vld [vmem:[%s0 + $0x20] sm:$0xf]
  %v574 = vld [vmem:[%s0 + $0x24] sm:$0xf]
  %v575 = vld [vmem:[%s0 + $0x28] sm:$0x1]
  %vm576 = vsmask.f32 3328
  %vm577 = vsmask.f32 7440
  %vm578 = vmor %vm576, %vm577
  %v580 = vshrl.u32 %v570, 16
  %v582 = vrot.slane %v580, 4
  %v583 = vshll.u32 %v570, 16
  %v585 = vrot.slane %v583, 5
  %v586 = vor.u32 %v582, %v585
  %v587 = vrot.slane %v586, 4
  %v589 = vshll.u32 %v571, 16
  %v591 = vrot.slane %v589, 5
  %v592 = vsel %vm578, %v587, %v591
  %v593 = vshrl.u32 %v571, 16
  %v595 = vrot.slane %v593, 4
  %v596 = vor.u32 %v595, %v591
  %v597 = vrot.slane %v596, 4
  %v599 = vshll.u32 %v572, 16
  %v601 = vrot.slane %v599, 5
  %v602 = vsel %vm578, %v597, %v601
  %v604 = vshrl.u32 %v573, 16
  %v606 = vrot.slane %v604, 4
  %v607 = vshll.u32 %v573, 16
  %v609 = vrot.slane %v607, 5
  %v610 = vor.u32 %v606, %v609
  %v611 = vrot.slane %v610, 4
  %v613 = vshll.u32 %v574, 16
  %v615 = vrot.slane %v613, 5
  %v616 = vsel %vm578, %v611, %v615
  %v617 = vshrl.u32 %v574, 16
  %v619 = vrot.slane %v617, 4
  %v620 = vor.u32 %v619, %v615
  %v621 = vrot.slane %v620, 4
  %v623 = vshll.u32 %v575, 16
  %v625 = vrot.slane %v623, 5
  %v626 = vsel %vm578, %v621, %v625
  %v627 = vld [vmem:[%s0 + $0x8] sm:$0xe]
  %v628 = vld [vmem:[%s0 + $0x20] sm:$0xe]
  %vm635 = vcmask 1042432
  %vm636 = vcmask 1046532
  %vm637 = vmor %vm635, %vm636
  %v638 = vrot.slane %v627, 5
  %v639 = vrot.slane %v638, 4
  %v640 = vrot.slane %v571, 5
  %v641 = vsel %vm637, %v639, %v640
  %v642 = vrot.slane %v640, 4
  %v643 = vrot.slane %v572, 5
  %v644 = vsel %vm637, %v642, %v643
  %v645 = vrot.slane %v628, 5
  %v646 = vrot.slane %v645, 4
  %v647 = vrot.slane %v574, 5
  %v648 = vsel %vm637, %v646, %v647
  %v649 = vrot.slane %v647, 4
  %v650 = vrot.slane %v575, 5
  %v651 = vsel %vm637, %v649, %v650
  %v652 = vunpack.c.l.b16 %v592
  %v653 = vunpack.c.l.b16 %v602
  %v654 = vunpack.c.l.b16 %v616
  %v655 = vunpack.c.l.b16 %v626
  %v656 = vpack.c.b16 %v653, %v652
  %v657 = vpack.c.b16 %v655, %v654
  %v660 = vunpack.c.l.b16 %v641
  %v661 = vunpack.c.l.b16 %v644
  %v662 = vunpack.c.l.b16 %v648
  %v663 = vunpack.c.l.b16 %v651
  %v664 = vpack.c.b16 %v661, %v660
  %v665 = vpack.c.b16 %v663, %v662
  %v668 = vld [vmem:[%s1 + $0x100] sm:$0xf]
  %v669 = vld [vmem:[%s1 + $0x104] sm:$0xf]
  %v670 = vld [vmem:[%s1 + $0x108] sm:$0xf]
  %v671 = vld [vmem:[%s1 + $0x10c] sm:$0xf]
  %v672 = vld [vmem:[%s1 + $0x110] sm:$0xf]
  %v673 = vld [vmem:[%s1 + $0x114] sm:$0xf]
  %v674 = vld [vmem:[%s1 + $0x118] sm:$0xf]
  %v675 = vld [vmem:[%s1 + $0x11c] sm:$0xf]
  %v676 = vld [vmem:[%s1 + $0x120] sm:$0xf]
  %v677 = vld [vmem:[%s1 + $0x124] sm:$0xf]
  %v678 = vld [vmem:[%s1 + $0x128] sm:$0xf]
  %v679 = vld [vmem:[%s1 + $0x12c] sm:$0xf]
  %v680 = vld [vmem:[%s1 + $0x130] sm:$0xf]
  %v681 = vld [vmem:[%s1 + $0x134] sm:$0xf]
  %v682 = vld [vmem:[%s1 + $0x138] sm:$0xf]
  %v683 = vld [vmem:[%s1 + $0x13c] sm:$0xf]
  %v684 = vld [vmem:[%s1 + $0x140] sm:$0xf]
  %v685 = vld [vmem:[%s1 + $0x144] sm:$0xf]
  %v686 = vld [vmem:[%s1 + $0x148] sm:$0xf]
  %v687 = vld [vmem:[%s1 + $0x14c] sm:$0xf]
  %v688 = vld [vmem:[%s1 + $0x150] sm:$0xf]
  %v689 = vld [vmem:[%s1 + $0x154] sm:$0xf]
  %v690 = vld [vmem:[%s1 + $0x158] sm:$0xf]
  %v691 = vld [vmem:[%s1 + $0x15c] sm:$0xf]
  %v692 = vld [vmem:[%s1 + $0x160] sm:$0xf]
  %v693 = vld [vmem:[%s1 + $0x164] sm:$0xf]
  %v694 = vld [vmem:[%s1 + $0x168] sm:$0xf]
  %v695 = vld [vmem:[%s1 + $0x16c] sm:$0xf]
  %v696 = vld [vmem:[%s1 + $0x170] sm:$0xf]
  %v697 = vld [vmem:[%s1 + $0x174] sm:$0xf]
  %v698 = vld [vmem:[%s1 + $0x178] sm:$0xf]
  %v699 = vld [vmem:[%s1 + $0x17c] sm:$0xf]
  %v732 = vunpack.c.l.b16 %v668
  %v733 = vunpack.c.l.b16 %v669
  %v734 = vunpack.c.l.b16 %v670
  %v735 = vunpack.c.l.b16 %v671
  %v736 = vunpack.c.l.b16 %v672
  %v737 = vunpack.c.l.b16 %v673
  %v738 = vunpack.c.l.b16 %v674
  %v739 = vunpack.c.l.b16 %v675
  %v740 = vunpack.c.l.b16 %v676
  %v741 = vunpack.c.l.b16 %v677
  %v742 = vunpack.c.l.b16 %v678
  %v743 = vunpack.c.l.b16 %v679
  %v744 = vunpack.c.l.b16 %v680
  %v745 = vunpack.c.l.b16 %v681
  %v746 = vunpack.c.l.b16 %v682
  %v747 = vunpack.c.l.b16 %v683
  %v748 = vunpack.c.l.b16 %v684
  %v749 = vunpack.c.l.b16 %v685
  %v750 = vunpack.c.l.b16 %v686
  %v751 = vunpack.c.l.b16 %v687
  %v752 = vunpack.c.l.b16 %v688
  %v753 = vunpack.c.l.b16 %v689
  %v754 = vunpack.c.l.b16 %v690
  %v755 = vunpack.c.l.b16 %v691
  %v756 = vunpack.c.l.b16 %v692
  %v757 = vunpack.c.l.b16 %v693
  %v758 = vunpack.c.l.b16 %v694
  %v759 = vunpack.c.l.b16 %v695
  %v760 = vunpack.c.l.b16 %v696
  %v761 = vunpack.c.l.b16 %v697
  %v762 = vunpack.c.l.b16 %v698
  %v763 = vunpack.c.l.b16 %v699
  %v764 = vpack.c.b16 %v733, %v732
  %v765 = vpack.c.b16 %v735, %v734
  %v766 = vpack.c.b16 %v737, %v736
  %v767 = vpack.c.b16 %v739, %v738
  %v768 = vpack.c.b16 %v741, %v740
  %v769 = vpack.c.b16 %v743, %v742
  %v770 = vpack.c.b16 %v745, %v744
  %v771 = vpack.c.b16 %v747, %v746
  %v772 = vpack.c.b16 %v749, %v748
  %v773 = vpack.c.b16 %v751, %v750
  %v774 = vpack.c.b16 %v753, %v752
  %v775 = vpack.c.b16 %v755, %v754
  %v776 = vpack.c.b16 %v757, %v756
  %v777 = vpack.c.b16 %v759, %v758
  %v778 = vpack.c.b16 %v761, %v760
  %v779 = vpack.c.b16 %v763, %v762
  %796 = vmatprep.subr.bf16.mxu0 0
  %797 = vmatpush1.bf16.msra.mxu0 %v771
  %798 = vmatprep.subr.bf16.mxu0 0
  %799 = vmatpush1.bf16.msra.mxu0 %v770
  %800 = vmatprep.subr.bf16.mxu0 0
  %801 = vmatpush1.bf16.msra.mxu0 %v769
  %802 = vmatprep.subr.bf16.mxu0 0
  %803 = vmatpush1.bf16.msra.mxu0 %v768
  %804 = vmatprep.subr.bf16.mxu0 0
  %805 = vmatpush1.bf16.msra.mxu0 %v767
  %806 = vmatprep.subr.bf16.mxu0 0
  %807 = vmatpush1.bf16.msra.mxu0 %v766
  %808 = vmatprep.subr.bf16.mxu0 0
  %809 = vmatpush1.bf16.msra.mxu0 %v765
  %810 = vmatprep.subr.bf16.mxu0 0
  %811 = vmatpush1.bf16.msra.mxu0 %v764
  %812 = vmatprep.subr.bf16.mxu0 0
  %813 = vmatpush2.bf16.msra.mxu0 %v779
  %814 = vmatprep.subr.bf16.mxu0 0
  %815 = vmatpush2.bf16.msra.mxu0 %v778
  %816 = vmatprep.subr.bf16.mxu0 0
  %817 = vmatpush2.bf16.msra.mxu0 %v777
  %818 = vmatprep.subr.bf16.mxu0 0
  %819 = vmatpush2.bf16.msra.mxu0 %v776
  %820 = vmatprep.subr.bf16.mxu0 0
  %821 = vmatpush2.bf16.msra.mxu0 %v775
  %822 = vmatprep.subr.bf16.mxu0 0
  %823 = vmatpush2.bf16.msra.mxu0 %v774
  %824 = vmatprep.subr.bf16.mxu0 0
  %825 = vmatpush2.bf16.msra.mxu0 %v773
  %826 = vmatprep.subr.bf16.mxu0 0
  %827 = vmatpush2.bf16.msra.mxu0 %v772
  %828 = vmatprep.mubr.bf16.mxu0 %v664
  %829 = vmatmul.mubr.bf16.gmra.mxu0 %v656
  %v830 = vpop.f32.mrf.mxu0
  %v831 = vadd.f32 0.0, %v830
  %v832 = vpop.f32.mrf.mxu0
  %v833 = vpop.f32.mrf.mxu0
  %v834 = vadd.f32 0.0, %v833
  %v835 = vpop.f32.mrf.mxu0
  %836 = vmatprep.mubr.bf16.mxu0 %v665
  %837 = vmatmul.mubr.bf16.gmra.mxu0 %v657
  %v838 = vpop.f32.mrf.mxu0
  %v839 = vadd.f32 0.0, %v838
  %v840 = vpop.f32.mrf.mxu0
  %v841 = vpop.f32.mrf.mxu0
  %v842 = vadd.f32 0.0, %v841
  %v843 = vpop.f32.mrf.mxu0
  %844 = vdwg.mxu0
  %v845 = vadd.f32 %v556, %v831
  %v846 = vadd.f32 %v559, %v834
  %v847 = vadd.f32 %v564, %v839
  %v848 = vadd.f32 %v567, %v842
  %v849 = vld [vmem:[%s0 + $0x10] sm:$0x3]
  %v850 = vld [vmem:[%s0 + $0x28] sm:$0x3]
  %vm851 = vsmask.f32 2304
  %vm852 = vsmask.f32 6416
  %vm853 = vmor %vm851, %vm852
  %v855 = vshrl.u32 %v627, 16
  %v857 = vrot.slane %v855, 5
  %v858 = vshll.u32 %v627, 16
  %v860 = vrot.slane %v858, 6
  %v861 = vor.u32 %v857, %v860
  %v862 = vrot.slane %v861, 4
  %v863 = vrot.slane %v593, 5
  %v864 = vrot.slane %v589, 6
  %v865 = vor.u32 %v863, %v864
  %v866 = vsel %vm853, %v862, %v865
  %v867 = vrot.slane %v865, 4
  %v869 = vshrl.u32 %v849, 16
  %v871 = vrot.slane %v869, 5
  %v872 = vshll.u32 %v849, 16
  %v874 = vrot.slane %v872, 6
  %v875 = vor.u32 %v871, %v874
  %v876 = vsel %vm853, %v867, %v875
  %v878 = vshrl.u32 %v628, 16
  %v880 = vrot.slane %v878, 5
  %v881 = vshll.u32 %v628, 16
  %v883 = vrot.slane %v881, 6
  %v884 = vor.u32 %v880, %v883
  %v885 = vrot.slane %v884, 4
  %v886 = vrot.slane %v617, 5
  %v887 = vrot.slane %v613, 6
  %v888 = vor.u32 %v886, %v887
  %v889 = vsel %vm853, %v885, %v888
  %v890 = vrot.slane %v888, 4
  %v892 = vshrl.u32 %v850, 16
  %v894 = vrot.slane %v892, 5
  %v895 = vshll.u32 %v850, 16
  %v897 = vrot.slane %v895, 6
  %v898 = vor.u32 %v894, %v897
  %v899 = vsel %vm853, %v890, %v898
  %v900 = vld [vmem:[%s1 + $0x180] sm:$0xf]
  %v901 = vld [vmem:[%s1 + $0x184] sm:$0xf]
  %v902 = vld [vmem:[%s1 + $0x188] sm:$0xf]
  %v903 = vld [vmem:[%s1 + $0x18c] sm:$0xf]
  %v904 = vld [vmem:[%s1 + $0x190] sm:$0xf]
  %v905 = vld [vmem:[%s1 + $0x194] sm:$0xf]
  %v906 = vld [vmem:[%s1 + $0x198] sm:$0xf]
  %v907 = vld [vmem:[%s1 + $0x19c] sm:$0xf]
  %v908 = vld [vmem:[%s1 + $0x1a0] sm:$0xf]
  %v909 = vld [vmem:[%s1 + $0x1a4] sm:$0xf]
  %v910 = vld [vmem:[%s1 + $0x1a8] sm:$0xf]
  %v911 = vld [vmem:[%s1 + $0x1ac] sm:$0xf]
  %v912 = vld [vmem:[%s1 + $0x1b0] sm:$0xf]
  %v913 = vld [vmem:[%s1 + $0x1b4] sm:$0xf]
  %v914 = vld [vmem:[%s1 + $0x1b8] sm:$0xf]
  %v915 = vld [vmem:[%s1 + $0x1bc] sm:$0xf]
  %v916 = vunpack.c.l.b16 %v866
  %v917 = vunpack.c.l.b16 %v876
  %v918 = vunpack.c.l.b16 %v889
  %v919 = vunpack.c.l.b16 %v899
  %v920 = vpack.c.b16 %v917, %v916
  %v921 = vpack.c.b16 %v919, %v918
  %v940 = vunpack.c.l.b16 %v900
  %v941 = vunpack.c.l.b16 %v901
  %v942 = vunpack.c.l.b16 %v902
  %v943 = vunpack.c.l.b16 %v903
  %v944 = vunpack.c.l.b16 %v904
  %v945 = vunpack.c.l.b16 %v905
  %v946 = vunpack.c.l.b16 %v906
  %v947 = vunpack.c.l.b16 %v907
  %v948 = vunpack.c.l.b16 %v908
  %v949 = vunpack.c.l.b16 %v909
  %v950 = vunpack.c.l.b16 %v910
  %v951 = vunpack.c.l.b16 %v911
  %v952 = vunpack.c.l.b16 %v912
  %v953 = vunpack.c.l.b16 %v913
  %v954 = vunpack.c.l.b16 %v914
  %v955 = vunpack.c.l.b16 %v915
  %v956 = vpack.c.b16 %v941, %v940
  %v957 = vpack.c.b16 %v943, %v942
  %v958 = vpack.c.b16 %v945, %v944
  %v959 = vpack.c.b16 %v947, %v946
  %v960 = vpack.c.b16 %v949, %v948
  %v961 = vpack.c.b16 %v951, %v950
  %v962 = vpack.c.b16 %v953, %v952
  %v963 = vpack.c.b16 %v955, %v954
  %972 = vmatprep.subr.bf16.mxu0 0
  %973 = vmatpush1.bf16.msra.mxu0 %v963
  %974 = vmatprep.subr.bf16.mxu0 0
  %975 = vmatpush1.bf16.msra.mxu0 %v962
  %976 = vmatprep.subr.bf16.mxu0 0
  %977 = vmatpush1.bf16.msra.mxu0 %v961
  %978 = vmatprep.subr.bf16.mxu0 0
  %979 = vmatpush1.bf16.msra.mxu0 %v960
  %980 = vmatprep.subr.bf16.mxu0 0
  %981 = vmatpush1.bf16.msra.mxu0 %v959
  %982 = vmatprep.subr.bf16.mxu0 0
  %983 = vmatpush1.bf16.msra.mxu0 %v958
  %984 = vmatprep.subr.bf16.mxu0 0
  %985 = vmatpush1.bf16.msra.mxu0 %v957
  %986 = vmatprep.subr.bf16.mxu0 0
  %987 = vmatpush1.bf16.msra.mxu0 %v956
  %988 = vmatprep.subr.bf16.mxu0 0
  %989 = vmatpush2.bf16.msra.mxu0 0
  %990 = vmatprep.subr.bf16.mxu0 0
  %991 = vmatpush2.bf16.msra.mxu0 0
  %992 = vmatprep.subr.bf16.mxu0 0
  %993 = vmatpush2.bf16.msra.mxu0 0
  %994 = vmatprep.subr.bf16.mxu0 0
  %995 = vmatpush2.bf16.msra.mxu0 0
  %996 = vmatprep.subr.bf16.mxu0 0
  %997 = vmatpush2.bf16.msra.mxu0 0
  %998 = vmatprep.subr.bf16.mxu0 0
  %999 = vmatpush2.bf16.msra.mxu0 0
  %1000 = vmatprep.subr.bf16.mxu0 0
  %1001 = vmatpush2.bf16.msra.mxu0 0
  %1002 = vmatprep.subr.bf16.mxu0 0
  %1003 = vmatpush2.bf16.msra.mxu0 0
  %1004 = vmatprep.mubr.bf16.mxu0 0
  %1005 = vmatmul.mubr.bf16.gmra.mxu0 %v920
  %v1006 = vpop.f32.mrf.mxu0
  %v1007 = vadd.f32 0.0, %v1006
  %v1008 = vpop.f32.mrf.mxu0
  %v1009 = vpop.f32.mrf.mxu0
  %v1010 = vadd.f32 0.0, %v1009
  %v1011 = vpop.f32.mrf.mxu0
  %1012 = vmatprep.mubr.bf16.mxu0 0
  %1013 = vmatmul.mubr.bf16.gmra.mxu0 %v921
  %v1014 = vpop.f32.mrf.mxu0
  %v1015 = vadd.f32 0.0, %v1014
  %v1016 = vpop.f32.mrf.mxu0
  %v1017 = vpop.f32.mrf.mxu0
  %v1018 = vadd.f32 0.0, %v1017
  %v1019 = vpop.f32.mrf.mxu0
  %1020 = vdwg.mxu0
  %v1021 = vadd.f32 %v845, %v1007
  %v1022 = vadd.f32 %v846, %v1010
  %v1023 = vadd.f32 %v847, %v1015
  %v1024 = vadd.f32 %v848, %v1018
  %v1025 = vadd.f32 %v1021, %v1022
  %v1026 = vadd.f32 %v1025, %v1023
  %v1027 = vadd.f32 %v1026, %v1024
  %v1028 = vrot.slane %v1027, 4
  %v1029 = vadd.f32 %v1027, %v1028
  %v1030 = vrot.slane %v1029, 2
  %v1031 = vadd.f32 %v1029, %v1030
  %v1032 = vrot.slane %v1031, 1
  %v1033 = vadd.f32 %v1031, %v1032
  %v1034 = vmul.f32 %v1033, 0.03125
  %v1035 = vsub.f32 %v1021, %v1034
  %v1036 = vsub.f32 %v1022, %v1034
  %v1037 = vsub.f32 %v1023, %v1034
  %v1038 = vsub.f32 %v1024, %v1034
  %v1039 = vmul.f32 %v1035, %v1035
  %v1040 = vmul.f32 %v1036, %v1036
  %v1041 = vmul.f32 %v1037, %v1037
  %v1042 = vmul.f32 %v1038, %v1038
  %v1043 = vadd.f32 %v1039, %v1040
  %v1044 = vadd.f32 %v1043, %v1041
  %v1045 = vadd.f32 %v1044, %v1042
  %v1046 = vrot.slane %v1045, 4
  %v1047 = vadd.f32 %v1045, %v1046
  %v1048 = vrot.slane %v1047, 2
  %v1049 = vadd.f32 %v1047, %v1048
  %v1050 = vrot.slane %v1049, 1
  %v1051 = vadd.f32 %v1049, %v1050
  %v1052 = vmul.f32 %v1051, 0.03125
  %v1053 = vld [vmem:[%s2] sm:$0x1]
  %v1054 = vadd.f32 %v1052, 1e-05
  %v1055 = vrsqrt.pop %v1054
  %v1056 = vmul.f32 %v1053, %v1055
  %v1058 = vlaneseq
  %v1059 = vshrl.u32 %v1058, 7
  %v1060 = vsub.s32 0, %v1059
  %v1061 = vrot.slane %v1056, %v1060
  %v1063 = vmul.f32 %v1035, %v1061
  %v1064 = vmul.f32 %v1036, %v1061
  %v1065 = vmul.f32 %v1037, %v1061
  %v1066 = vmul.f32 %v1038, %v1061
  %v1067 = vld [vmem:[%s3] sm:$0x1]
  %v1069 = vlaneseq
  %v1070 = vshrl.u32 %v1069, 7
  %v1071 = vsub.s32 0, %v1070
  %v1072 = vrot.slane %v1067, %v1071
  %v1074 = vadd.f32 %v1063, %v1072
  %v1075 = vadd.f32 %v1064, %v1072
  %v1076 = vadd.f32 %v1065, %v1072
  %v1077 = vadd.f32 %v1066, %v1072
  %v1078 = vmax.f32 %v1074, 0.0
  %v1079 = vmax.f32 %v1075, 0.0
  %v1080 = vmax.f32 %v1076, 0.0
  %v1081 = vmax.f32 %v1077, 0.0
  %v1082 = vpack.c.bf16 %v1079, %v1078
  %v1083 = vpack.c.bf16 %v1081, %v1080
  %v1086 = vunpack.c.l.b16 %v1082
  %v1087 = vunpack.c.h.b16 %v1082
  %v1088 = vunpack.c.l.b16 %v1083
  %v1089 = vunpack.c.h.b16 %v1083
  %v1090 = vpack.c.b16 %v1086, %v1086
  %v1091 = vpack.c.b16 %v1087, %v1087
  %v1092 = vpack.c.b16 %v1088, %v1088
  %v1093 = vpack.c.b16 %v1089, %v1089
  %1098 = vst [vmem:[#allocation2 + $0x8] sm:$0xf] %v1090
  %1099 = vst [vmem:[#allocation2 + $0xc] sm:$0xf] %v1091
  %1100 = vst [vmem:[#allocation2 + $0x20] sm:$0xf] %v1092
  %1101 = vst [vmem:[#allocation2 + $0x24] sm:$0xf] %v1093
  %v1102 = vld [vmem:[#allocation2 + $0x4] sm:$0x8]
  %v1103 = vld [vmem:[#allocation2 + $0x8] sm:$0xf]
  %v1104 = vld [vmem:[#allocation2 + $0xc] sm:$0x7]
  %v1105 = vld [vmem:[#allocation2 + $0x1c] sm:$0x8]
  %v1106 = vld [vmem:[#allocation2 + $0x20] sm:$0xf]
  %v1107 = vld [vmem:[#allocation2 + $0x24] sm:$0x7]
  %v1114 = vrot.slane %v1102, 7
  %v1115 = vrot.slane %v1114, 4
  %v1116 = vrot.slane %v1103, 7
  %v1117 = vsel %vm128, %v1115, %v1116
  %v1118 = vrot.slane %v1116, 4
  %v1119 = vrot.slane %v1104, 7
  %v1120 = vsel %vm128, %v1118, %v1119
  %v1121 = vrot.slane %v1105, 7
  %v1122 = vrot.slane %v1121, 4
  %v1123 = vrot.slane %v1106, 7
  %v1124 = vsel %vm128, %v1122, %v1123
  %v1125 = vrot.slane %v1123, 4
  %v1126 = vrot.slane %v1107, 7
  %v1127 = vsel %vm128, %v1125, %v1126
  %v1128 = vld [vmem:[#allocation2 + $0xc] sm:$0xf]
  %v1129 = vld [vmem:[#allocation2 + $0x24] sm:$0xf]
  %v1131 = vshrl.u32 %v1102, 16
  %v1133 = vrot.slane %v1131, 7
  %v1134 = vrot.slane %v1133, 4
  %v1136 = vshrl.u32 %v1103, 16
  %v1138 = vrot.slane %v1136, 7
  %v1139 = vshll.u32 %v1103, 16
  %v1141 = vor.u32 %v1138, %v1139
  %v1142 = vsel %vm195, %v1134, %v1141
  %v1143 = vrot.slane %v1138, 4
  %v1145 = vshrl.u32 %v1128, 16
  %v1147 = vrot.slane %v1145, 7
  %v1148 = vshll.u32 %v1128, 16
  %v1150 = vor.u32 %v1147, %v1148
  %v1151 = vsel %vm195, %v1143, %v1150
  %v1153 = vshrl.u32 %v1105, 16
  %v1155 = vrot.slane %v1153, 7
  %v1156 = vrot.slane %v1155, 4
  %v1158 = vshrl.u32 %v1106, 16
  %v1160 = vrot.slane %v1158, 7
  %v1161 = vshll.u32 %v1106, 16
  %v1163 = vor.u32 %v1160, %v1161
  %v1164 = vsel %vm195, %v1156, %v1163
  %v1165 = vrot.slane %v1160, 4
  %v1167 = vshrl.u32 %v1129, 16
  %v1169 = vrot.slane %v1167, 7
  %v1170 = vshll.u32 %v1129, 16
  %v1172 = vor.u32 %v1169, %v1170
  %v1173 = vsel %vm195, %v1165, %v1172
  %v1174 = vunpack.c.l.b16 %v1117
  %v1175 = vunpack.c.l.b16 %v1120
  %v1176 = vunpack.c.l.b16 %v1124
  %v1177 = vunpack.c.l.b16 %v1127
  %v1178 = vpack.c.b16 %v1175, %v1174
  %v1179 = vpack.c.b16 %v1177, %v1176
  %v1182 = vunpack.c.l.b16 %v1142
  %v1183 = vunpack.c.l.b16 %v1151
  %v1184 = vunpack.c.l.b16 %v1164
  %v1185 = vunpack.c.l.b16 %v1173
  %v1186 = vpack.c.b16 %v1183, %v1182
  %v1187 = vpack.c.b16 %v1185, %v1184
  %v1190 = vld [vmem:[%s4] sm:$0xf]
  %v1191 = vld [vmem:[%s4 + $0x4] sm:$0xf]
  %v1192 = vld [vmem:[%s4 + $0x8] sm:$0xf]
  %v1193 = vld [vmem:[%s4 + $0xc] sm:$0xf]
  %v1194 = vld [vmem:[%s4 + $0x10] sm:$0xf]
  %v1195 = vld [vmem:[%s4 + $0x14] sm:$0xf]
  %v1196 = vld [vmem:[%s4 + $0x18] sm:$0xf]
  %v1197 = vld [vmem:[%s4 + $0x1c] sm:$0xf]
  %v1198 = vld [vmem:[%s4 + $0x20] sm:$0xf]
  %v1199 = vld [vmem:[%s4 + $0x24] sm:$0xf]
  %v1200 = vld [vmem:[%s4 + $0x28] sm:$0xf]
  %v1201 = vld [vmem:[%s4 + $0x2c] sm:$0xf]
  %v1202 = vld [vmem:[%s4 + $0x30] sm:$0xf]
  %v1203 = vld [vmem:[%s4 + $0x34] sm:$0xf]
  %v1204 = vld [vmem:[%s4 + $0x38] sm:$0xf]
  %v1205 = vld [vmem:[%s4 + $0x3c] sm:$0xf]
  %v1206 = vld [vmem:[%s4 + $0x40] sm:$0xf]
  %v1207 = vld [vmem:[%s4 + $0x44] sm:$0xf]
  %v1208 = vld [vmem:[%s4 + $0x48] sm:$0xf]
  %v1209 = vld [vmem:[%s4 + $0x4c] sm:$0xf]
  %v1210 = vld [vmem:[%s4 + $0x50] sm:$0xf]
  %v1211 = vld [vmem:[%s4 + $0x54] sm:$0xf]
  %v1212 = vld [vmem:[%s4 + $0x58] sm:$0xf]
  %v1213 = vld [vmem:[%s4 + $0x5c] sm:$0xf]
  %v1214 = vld [vmem:[%s4 + $0x60] sm:$0xf]
  %v1215 = vld [vmem:[%s4 + $0x64] sm:$0xf]
  %v1216 = vld [vmem:[%s4 + $0x68] sm:$0xf]
  %v1217 = vld [vmem:[%s4 + $0x6c] sm:$0xf]
  %v1218 = vld [vmem:[%s4 + $0x70] sm:$0xf]
  %v1219 = vld [vmem:[%s4 + $0x74] sm:$0xf]
  %v1220 = vld [vmem:[%s4 + $0x78] sm:$0xf]
  %v1221 = vld [vmem:[%s4 + $0x7c] sm:$0xf]
  %v1222 = vld [vmem:[#allocation2 + $0x10] sm:$0x1]
  %v1223 = vld [vmem:[#allocation2 + $0x28] sm:$0x1]
  %v1224 = vrot.slane %v1136, 4
  %v1225 = vrot.slane %v1139, 5
  %v1226 = vor.u32 %v1224, %v1225
  %v1227 = vrot.slane %v1226, 4
  %v1228 = vrot.slane %v1148, 5
  %v1229 = vsel %vm578, %v1227, %v1228
  %v1230 = vrot.slane %v1145, 4
  %v1231 = vor.u32 %v1230, %v1228
  %v1232 = vrot.slane %v1231, 4
  %v1234 = vshll.u32 %v1222, 16
  %v1236 = vrot.slane %v1234, 5
  %v1237 = vsel %vm578, %v1232, %v1236
  %v1238 = vrot.slane %v1158, 4
  %v1239 = vrot.slane %v1161, 5
  %v1240 = vor.u32 %v1238, %v1239
  %v1241 = vrot.slane %v1240, 4
  %v1242 = vrot.slane %v1170, 5
  %v1243 = vsel %vm578, %v1241, %v1242
  %v1244 = vrot.slane %v1167, 4
  %v1245 = vor.u32 %v1244, %v1242
  %v1246 = vrot.slane %v1245, 4
  %v1248 = vshll.u32 %v1223, 16
  %v1250 = vrot.slane %v1248, 5
  %v1251 = vsel %vm578, %v1246, %v1250
  %v1254 = vunpack.c.l.b16 %v1103
  %v1255 = vunpack.c.l.b16 %v1128
  %v1256 = vunpack.c.l.b16 %v1106
  %v1257 = vunpack.c.l.b16 %v1129
  %v1258 = vpack.c.b16 %v1255, %v1254
  %v1259 = vpack.c.b16 %v1257, %v1256
  %v1262 = vunpack.c.l.b16 %v1229
  %v1263 = vunpack.c.l.b16 %v1237
  %v1264 = vunpack.c.l.b16 %v1243
  %v1265 = vunpack.c.l.b16 %v1251
  %v1266 = vpack.c.b16 %v1263, %v1262
  %v1267 = vpack.c.b16 %v1265, %v1264
  %v1270 = vld [vmem:[%s4 + $0x80] sm:$0xf]
  %v1271 = vld [vmem:[%s4 + $0x84] sm:$0xf]
  %v1272 = vld [vmem:[%s4 + $0x88] sm:$0xf]
  %v1273 = vld [vmem:[%s4 + $0x8c] sm:$0xf]
  %v1274 = vld [vmem:[%s4 + $0x90] sm:$0xf]
  %v1275 = vld [vmem:[%s4 + $0x94] sm:$0xf]
  %v1276 = vld [vmem:[%s4 + $0x98] sm:$0xf]
  %v1277 = vld [vmem:[%s4 + $0x9c] sm:$0xf]
  %v1278 = vld [vmem:[%s4 + $0xa0] sm:$0xf]
  %v1279 = vld [vmem:[%s4 + $0xa4] sm:$0xf]
  %v1280 = vld [vmem:[%s4 + $0xa8] sm:$0xf]
  %v1281 = vld [vmem:[%s4 + $0xac] sm:$0xf]
  %v1282 = vld [vmem:[%s4 + $0xb0] sm:$0xf]
  %v1283 = vld [vmem:[%s4 + $0xb4] sm:$0xf]
  %v1284 = vld [vmem:[%s4 + $0xb8] sm:$0xf]
  %v1285 = vld [vmem:[%s4 + $0xbc] sm:$0xf]
  %v1286 = vld [vmem:[%s4 + $0xc0] sm:$0xf]
  %v1287 = vld [vmem:[%s4 + $0xc4] sm:$0xf]
  %v1288 = vld [vmem:[%s4 + $0xc8] sm:$0xf]
  %v1289 = vld [vmem:[%s4 + $0xcc] sm:$0xf]
  %v1290 = vld [vmem:[%s4 + $0xd0] sm:$0xf]
  %v1291 = vld [vmem:[%s4 + $0xd4] sm:$0xf]
  %v1292 = vld [vmem:[%s4 + $0xd8] sm:$0xf]
  %v1293 = vld [vmem:[%s4 + $0xdc] sm:$0xf]
  %v1294 = vld [vmem:[%s4 + $0xe0] sm:$0xf]
  %v1295 = vld [vmem:[%s4 + $0xe4] sm:$0xf]
  %v1296 = vld [vmem:[%s4 + $0xe8] sm:$0xf]
  %v1297 = vld [vmem:[%s4 + $0xec] sm:$0xf]
  %v1298 = vld [vmem:[%s4 + $0xf0] sm:$0xf]
  %v1299 = vld [vmem:[%s4 + $0xf4] sm:$0xf]
  %v1300 = vld [vmem:[%s4 + $0xf8] sm:$0xf]
  %v1301 = vld [vmem:[%s4 + $0xfc] sm:$0xf]
  %v1334 = vunpack.c.l.b16 %v1270
  %v1335 = vunpack.c.l.b16 %v1271
  %v1336 = vunpack.c.l.b16 %v1272
  %v1337 = vunpack.c.l.b16 %v1273
  %v1338 = vunpack.c.l.b16 %v1274
  %v1339 = vunpack.c.l.b16 %v1275
  %v1340 = vunpack.c.l.b16 %v1276
  %v1341 = vunpack.c.l.b16 %v1277
  %v1342 = vunpack.c.l.b16 %v1278
  %v1343 = vunpack.c.l.b16 %v1279
  %v1344 = vunpack.c.l.b16 %v1280
  %v1345 = vunpack.c.l.b16 %v1281
  %v1346 = vunpack.c.l.b16 %v1282
  %v1347 = vunpack.c.l.b16 %v1283
  %v1348 = vunpack.c.l.b16 %v1284
  %v1349 = vunpack.c.l.b16 %v1285
  %v1350 = vunpack.c.l.b16 %v1286
  %v1351 = vunpack.c.l.b16 %v1287
  %v1352 = vunpack.c.l.b16 %v1288
  %v1353 = vunpack.c.l.b16 %v1289
  %v1354 = vunpack.c.l.b16 %v1290
  %v1355 = vunpack.c.l.b16 %v1291
  %v1356 = vunpack.c.l.b16 %v1292
  %v1357 = vunpack.c.l.b16 %v1293
  %v1358 = vunpack.c.l.b16 %v1294
  %v1359 = vunpack.c.l.b16 %v1295
  %v1360 = vunpack.c.l.b16 %v1296
  %v1361 = vunpack.c.l.b16 %v1297
  %v1362 = vunpack.c.l.b16 %v1298
  %v1363 = vunpack.c.l.b16 %v1299
  %v1364 = vunpack.c.l.b16 %v1300
  %v1365 = vunpack.c.l.b16 %v1301
  %v1366 = vpack.c.b16 %v1335, %v1334
  %v1367 = vpack.c.b16 %v1337, %v1336
  %v1368 = vpack.c.b16 %v1339, %v1338
  %v1369 = vpack.c.b16 %v1341, %v1340
  %v1370 = vpack.c.b16 %v1343, %v1342
  %v1371 = vpack.c.b16 %v1345, %v1344
  %v1372 = vpack.c.b16 %v1347, %v1346
  %v1373 = vpack.c.b16 %v1349, %v1348
  %v1374 = vpack.c.b16 %v1351, %v1350
  %v1375 = vpack.c.b16 %v1353, %v1352
  %v1376 = vpack.c.b16 %v1355, %v1354
  %v1377 = vpack.c.b16 %v1357, %v1356
  %v1378 = vpack.c.b16 %v1359, %v1358
  %v1379 = vpack.c.b16 %v1361, %v1360
  %v1380 = vpack.c.b16 %v1363, %v1362
  %v1381 = vpack.c.b16 %v1365, %v1364
  %1398 = vmatprep.subr.bf16.mxu0 0
  %1399 = vmatpush1.bf16.msra.mxu0 %v1373
  %1400 = vmatprep.subr.bf16.mxu0 0
  %1401 = vmatpush1.bf16.msra.mxu0 %v1372
  %1402 = vmatprep.subr.bf16.mxu0 0
  %1403 = vmatpush1.bf16.msra.mxu0 %v1371
  %1404 = vmatprep.subr.bf16.mxu0 0
  %1405 = vmatpush1.bf16.msra.mxu0 %v1370
  %1406 = vmatprep.subr.bf16.mxu0 0
  %1407 = vmatpush1.bf16.msra.mxu0 %v1369
  %1408 = vmatprep.subr.bf16.mxu0 0
  %1409 = vmatpush1.bf16.msra.mxu0 %v1368
  %1410 = vmatprep.subr.bf16.mxu0 0
  %1411 = vmatpush1.bf16.msra.mxu0 %v1367
  %1412 = vmatprep.subr.bf16.mxu0 0
  %1413 = vmatpush1.bf16.msra.mxu0 %v1366
  %1414 = vmatprep.subr.bf16.mxu0 0
  %1415 = vmatpush2.bf16.msra.mxu0 %v1381
  %1416 = vmatprep.subr.bf16.mxu0 0
  %1417 = vmatpush2.bf16.msra.mxu0 %v1380
  %1418 = vmatprep.subr.bf16.mxu0 0
  %1419 = vmatpush2.bf16.msra.mxu0 %v1379
  %1420 = vmatprep.subr.bf16.mxu0 0
  %1421 = vmatpush2.bf16.msra.mxu0 %v1378
  %1422 = vmatprep.subr.bf16.mxu0 0
  %1423 = vmatpush2.bf16.msra.mxu0 %v1377
  %1424 = vmatprep.subr.bf16.mxu0 0
  %1425 = vmatpush2.bf16.msra.mxu0 %v1376
  %1426 = vmatprep.subr.bf16.mxu0 0
  %1427 = vmatpush2.bf16.msra.mxu0 %v1375
  %1428 = vmatprep.subr.bf16.mxu0 0
  %1429 = vmatpush2.bf16.msra.mxu0 %v1374
  %1430 = vmatprep.mubr.bf16.mxu0 %v1266
  %1431 = vmatmul.mubr.bf16.gmra.mxu0 %v1258
  %v1432 = vpop.f32.mrf.mxu0
  %v1433 = vadd.f32 0.0, %v1432
  %v1434 = vpop.f32.mrf.mxu0
  %v1435 = vpop.f32.mrf.mxu0
  %v1436 = vadd.f32 0.0, %v1435
  %v1437 = vpop.f32.mrf.mxu0
  %1438 = vmatprep.mubr.bf16.mxu0 %v1267
  %1439 = vmatmul.mubr.bf16.gmra.mxu0 %v1259
  %v1440 = vpop.f32.mrf.mxu0
  %v1441 = vadd.f32 0.0, %v1440
  %v1442 = vpop.f32.mrf.mxu0
  %v1443 = vpop.f32.mrf.mxu0
  %v1444 = vadd.f32 0.0, %v1443
  %v1445 = vpop.f32.mrf.mxu0
  %1446 = vdwg.mxu0
  %v1479 = vunpack.c.l.b16 %v1190
  %v1480 = vunpack.c.l.b16 %v1191
  %v1481 = vunpack.c.l.b16 %v1192
  %v1482 = vunpack.c.l.b16 %v1193
  %v1483 = vunpack.c.l.b16 %v1194
  %v1484 = vunpack.c.l.b16 %v1195
  %v1485 = vunpack.c.l.b16 %v1196
  %v1486 = vunpack.c.l.b16 %v1197
  %v1487 = vunpack.c.l.b16 %v1198
  %v1488 = vunpack.c.l.b16 %v1199
  %v1489 = vunpack.c.l.b16 %v1200
  %v1490 = vunpack.c.l.b16 %v1201
  %v1491 = vunpack.c.l.b16 %v1202
  %v1492 = vunpack.c.l.b16 %v1203
  %v1493 = vunpack.c.l.b16 %v1204
  %v1494 = vunpack.c.l.b16 %v1205
  %v1495 = vunpack.c.l.b16 %v1206
  %v1496 = vunpack.c.l.b16 %v1207
  %v1497 = vunpack.c.l.b16 %v1208
  %v1498 = vunpack.c.l.b16 %v1209
  %v1499 = vunpack.c.l.b16 %v1210
  %v1500 = vunpack.c.l.b16 %v1211
  %v1501 = vunpack.c.l.b16 %v1212
  %v1502 = vunpack.c.l.b16 %v1213
  %v1503 = vunpack.c.l.b16 %v1214
  %v1504 = vunpack.c.l.b16 %v1215
  %v1505 = vunpack.c.l.b16 %v1216
  %v1506 = vunpack.c.l.b16 %v1217
  %v1507 = vunpack.c.l.b16 %v1218
  %v1508 = vunpack.c.l.b16 %v1219
  %v1509 = vunpack.c.l.b16 %v1220
  %v1510 = vunpack.c.l.b16 %v1221
  %v1511 = vpack.c.b16 %v1480, %v1479
  %v1512 = vpack.c.b16 %v1482, %v1481
  %v1513 = vpack.c.b16 %v1484, %v1483
  %v1514 = vpack.c.b16 %v1486, %v1485
  %v1515 = vpack.c.b16 %v1488, %v1487
  %v1516 = vpack.c.b16 %v1490, %v1489
  %v1517 = vpack.c.b16 %v1492, %v1491
  %v1518 = vpack.c.b16 %v1494, %v1493
  %v1519 = vpack.c.b16 %v1496, %v1495
  %v1520 = vpack.c.b16 %v1498, %v1497
  %v1521 = vpack.c.b16 %v1500, %v1499
  %v1522 = vpack.c.b16 %v1502, %v1501
  %v1523 = vpack.c.b16 %v1504, %v1503
  %v1524 = vpack.c.b16 %v1506, %v1505
  %v1525 = vpack.c.b16 %v1508, %v1507
  %v1526 = vpack.c.b16 %v1510, %v1509
  %1543 = vmatprep.subr.bf16.mxu0 0
  %1544 = vmatpush1.bf16.msra.mxu0 %v1518
  %1545 = vmatprep.subr.bf16.mxu0 0
  %1546 = vmatpush1.bf16.msra.mxu0 %v1517
  %1547 = vmatprep.subr.bf16.mxu0 0
  %1548 = vmatpush1.bf16.msra.mxu0 %v1516
  %1549 = vmatprep.subr.bf16.mxu0 0
  %1550 = vmatpush1.bf16.msra.mxu0 %v1515
  %1551 = vmatprep.subr.bf16.mxu0 0
  %1552 = vmatpush1.bf16.msra.mxu0 %v1514
  %1553 = vmatprep.subr.bf16.mxu0 0
  %1554 = vmatpush1.bf16.msra.mxu0 %v1513
  %1555 = vmatprep.subr.bf16.mxu0 0
  %1556 = vmatpush1.bf16.msra.mxu0 %v1512
  %1557 = vmatprep.subr.bf16.mxu0 0
  %1558 = vmatpush1.bf16.msra.mxu0 %v1511
  %1559 = vmatprep.subr.bf16.mxu0 0
  %1560 = vmatpush2.bf16.msra.mxu0 %v1526
  %1561 = vmatprep.subr.bf16.mxu0 0
  %1562 = vmatpush2.bf16.msra.mxu0 %v1525
  %1563 = vmatprep.subr.bf16.mxu0 0
  %1564 = vmatpush2.bf16.msra.mxu0 %v1524
  %1565 = vmatprep.subr.bf16.mxu0 0
  %1566 = vmatpush2.bf16.msra.mxu0 %v1523
  %1567 = vmatprep.subr.bf16.mxu0 0
  %1568 = vmatpush2.bf16.msra.mxu0 %v1522
  %1569 = vmatprep.subr.bf16.mxu0 0
  %1570 = vmatpush2.bf16.msra.mxu0 %v1521
  %1571 = vmatprep.subr.bf16.mxu0 0
  %1572 = vmatpush2.bf16.msra.mxu0 %v1520
  %1573 = vmatprep.subr.bf16.mxu0 0
  %1574 = vmatpush2.bf16.msra.mxu0 %v1519
  %1575 = vmatprep.mubr.bf16.mxu0 %v1186
  %1576 = vmatmul.mubr.bf16.gmra.mxu0 %v1178
  %v1577 = vpop.f32.mrf.mxu0
  %v1578 = vadd.f32 %v1433, %v1577
  %v1579 = vpop.f32.mrf.mxu0
  %v1580 = vpop.f32.mrf.mxu0
  %v1581 = vadd.f32 %v1436, %v1580
  %v1582 = vpop.f32.mrf.mxu0
  %1583 = vmatprep.mubr.bf16.mxu0 %v1187
  %1584 = vmatmul.mubr.bf16.gmra.mxu0 %v1179
  %v1585 = vpop.f32.mrf.mxu0
  %v1586 = vadd.f32 %v1441, %v1585
  %v1587 = vpop.f32.mrf.mxu0
  %v1588 = vpop.f32.mrf.mxu0
  %v1589 = vadd.f32 %v1444, %v1588
  %v1590 = vpop.f32.mrf.mxu0
  %1591 = vdwg.mxu0
  %v1592 = vld [vmem:[#allocation2 + $0x8] sm:$0xe]
  %v1593 = vld [vmem:[#allocation2 + $0x20] sm:$0xe]
  %v1598 = vrot.slane %v1592, 5
  %v1599 = vrot.slane %v1598, 4
  %v1600 = vrot.slane %v1128, 5
  %v1601 = vsel %vm637, %v1599, %v1600
  %v1602 = vrot.slane %v1600, 4
  %v1603 = vrot.slane %v1222, 5
  %v1604 = vsel %vm637, %v1602, %v1603
  %v1605 = vrot.slane %v1593, 5
  %v1606 = vrot.slane %v1605, 4
  %v1607 = vrot.slane %v1129, 5
  %v1608 = vsel %vm637, %v1606, %v1607
  %v1609 = vrot.slane %v1607, 4
  %v1610 = vrot.slane %v1223, 5
  %v1611 = vsel %vm637, %v1609, %v1610
  %v1612 = vld [vmem:[%s4 + $0x100] sm:$0xf]
  %v1613 = vld [vmem:[%s4 + $0x104] sm:$0xf]
  %v1614 = vld [vmem:[%s4 + $0x108] sm:$0xf]
  %v1615 = vld [vmem:[%s4 + $0x10c] sm:$0xf]
  %v1616 = vld [vmem:[%s4 + $0x110] sm:$0xf]
  %v1617 = vld [vmem:[%s4 + $0x114] sm:$0xf]
  %v1618 = vld [vmem:[%s4 + $0x118] sm:$0xf]
  %v1619 = vld [vmem:[%s4 + $0x11c] sm:$0xf]
  %v1620 = vld [vmem:[%s4 + $0x120] sm:$0xf]
  %v1621 = vld [vmem:[%s4 + $0x124] sm:$0xf]
  %v1622 = vld [vmem:[%s4 + $0x128] sm:$0xf]
  %v1623 = vld [vmem:[%s4 + $0x12c] sm:$0xf]
  %v1624 = vld [vmem:[%s4 + $0x130] sm:$0xf]
  %v1625 = vld [vmem:[%s4 + $0x134] sm:$0xf]
  %v1626 = vld [vmem:[%s4 + $0x138] sm:$0xf]
  %v1627 = vld [vmem:[%s4 + $0x13c] sm:$0xf]
  %v1628 = vunpack.c.l.b16 %v1601
  %v1629 = vunpack.c.l.b16 %v1604
  %v1630 = vunpack.c.l.b16 %v1608
  %v1631 = vunpack.c.l.b16 %v1611
  %v1632 = vpack.c.b16 %v1629, %v1628
  %v1633 = vpack.c.b16 %v1631, %v1630
  %v1652 = vunpack.c.l.b16 %v1612
  %v1653 = vunpack.c.l.b16 %v1613
  %v1654 = vunpack.c.l.b16 %v1614
  %v1655 = vunpack.c.l.b16 %v1615
  %v1656 = vunpack.c.l.b16 %v1616
  %v1657 = vunpack.c.l.b16 %v1617
  %v1658 = vunpack.c.l.b16 %v1618
  %v1659 = vunpack.c.l.b16 %v1619
  %v1660 = vunpack.c.l.b16 %v1620
  %v1661 = vunpack.c.l.b16 %v1621
  %v1662 = vunpack.c.l.b16 %v1622
  %v1663 = vunpack.c.l.b16 %v1623
  %v1664 = vunpack.c.l.b16 %v1624
  %v1665 = vunpack.c.l.b16 %v1625
  %v1666 = vunpack.c.l.b16 %v1626
  %v1667 = vunpack.c.l.b16 %v1627
  %v1668 = vpack.c.b16 %v1653, %v1652
  %v1669 = vpack.c.b16 %v1655, %v1654
  %v1670 = vpack.c.b16 %v1657, %v1656
  %v1671 = vpack.c.b16 %v1659, %v1658
  %v1672 = vpack.c.b16 %v1661, %v1660
  %v1673 = vpack.c.b16 %v1663, %v1662
  %v1674 = vpack.c.b16 %v1665, %v1664
  %v1675 = vpack.c.b16 %v1667, %v1666
  %1684 = vmatprep.subr.bf16.mxu0 0
  %1685 = vmatpush1.bf16.msra.mxu0 %v1675
  %1686 = vmatprep.subr.bf16.mxu0 0
  %1687 = vmatpush1.bf16.msra.mxu0 %v1674
  %1688 = vmatprep.subr.bf16.mxu0 0
  %1689 = vmatpush1.bf16.msra.mxu0 %v1673
  %1690 = vmatprep.subr.bf16.mxu0 0
  %1691 = vmatpush1.bf16.msra.mxu0 %v1672
  %1692 = vmatprep.subr.bf16.mxu0 0
  %1693 = vmatpush1.bf16.msra.mxu0 %v1671
  %1694 = vmatprep.subr.bf16.mxu0 0
  %1695 = vmatpush1.bf16.msra.mxu0 %v1670
  %1696 = vmatprep.subr.bf16.mxu0 0
  %1697 = vmatpush1.bf16.msra.mxu0 %v1669
  %1698 = vmatprep.subr.bf16.mxu0 0
  %1699 = vmatpush1.bf16.msra.mxu0 %v1668
  %1700 = vmatprep.subr.bf16.mxu0 0
  %1701 = vmatpush2.bf16.msra.mxu0 0
  %1702 = vmatprep.subr.bf16.mxu0 0
  %1703 = vmatpush2.bf16.msra.mxu0 0
  %1704 = vmatprep.subr.bf16.mxu0 0
  %1705 = vmatpush2.bf16.msra.mxu0 0
  %1706 = vmatprep.subr.bf16.mxu0 0
  %1707 = vmatpush2.bf16.msra.mxu0 0
  %1708 = vmatprep.subr.bf16.mxu0 0
  %1709 = vmatpush2.bf16.msra.mxu0 0
  %1710 = vmatprep.subr.bf16.mxu0 0
  %1711 = vmatpush2.bf16.msra.mxu0 0
  %1712 = vmatprep.subr.bf16.mxu0 0
  %1713 = vmatpush2.bf16.msra.mxu0 0
  %1714 = vmatprep.subr.bf16.mxu0 0
  %1715 = vmatpush2.bf16.msra.mxu0 0
  %1716 = vmatprep.mubr.bf16.mxu0 0
  %1717 = vmatmul.mubr.bf16.gmra.mxu0 %v1632
  %v1718 = vpop.f32.mrf.mxu0
  %v1719 = vadd.f32 0.0, %v1718
  %v1720 = vpop.f32.mrf.mxu0
  %v1721 = vpop.f32.mrf.mxu0
  %v1722 = vadd.f32 0.0, %v1721
  %v1723 = vpop.f32.mrf.mxu0
  %1724 = vmatprep.mubr.bf16.mxu0 0
  %1725 = vmatmul.mubr.bf16.gmra.mxu0 %v1633
  %v1726 = vpop.f32.mrf.mxu0
  %v1727 = vadd.f32 0.0, %v1726
  %v1728 = vpop.f32.mrf.mxu0
  %v1729 = vpop.f32.mrf.mxu0
  %v1730 = vadd.f32 0.0, %v1729
  %v1731 = vpop.f32.mrf.mxu0
  %1732 = vdwg.mxu0
  %v1733 = vadd.f32 %v1578, %v1719
  %v1734 = vadd.f32 %v1581, %v1722
  %v1735 = vadd.f32 %v1586, %v1727
  %v1736 = vadd.f32 %v1589, %v1730
  %v1737 = vadd.f32 %v1733, %v1734
  %v1738 = vadd.f32 %v1737, %v1735
  %v1739 = vadd.f32 %v1738, %v1736
  %v1740 = vrot.slane %v1739, 4
  %v1741 = vadd.f32 %v1739, %v1740
  %v1742 = vrot.slane %v1741, 2
  %v1743 = vadd.f32 %v1741, %v1742
  %v1744 = vrot.slane %v1743, 1
  %v1745 = vadd.f32 %v1743, %v1744
  %v1746 = vmul.f32 %v1745, 0.03125
  %v1747 = vsub.f32 %v1733, %v1746
  %v1748 = vsub.f32 %v1734, %v1746
  %v1749 = vsub.f32 %v1735, %v1746
  %v1750 = vsub.f32 %v1736, %v1746
  %v1751 = vmul.f32 %v1747, %v1747
  %v1752 = vmul.f32 %v1748, %v1748
  %v1753 = vmul.f32 %v1749, %v1749
  %v1754 = vmul.f32 %v1750, %v1750
  %v1755 = vadd.f32 %v1751, %v1752
  %v1756 = vadd.f32 %v1755, %v1753
  %v1757 = vadd.f32 %v1756, %v1754
  %v1758 = vrot.slane %v1757, 4
  %v1759 = vadd.f32 %v1757, %v1758
  %v1760 = vrot.slane %v1759, 2
  %v1761 = vadd.f32 %v1759, %v1760
  %v1762 = vrot.slane %v1761, 1
  %v1763 = vadd.f32 %v1761, %v1762
  %v1764 = vmul.f32 %v1763, 0.03125
  %v1765 = vld [vmem:[%s5] sm:$0x1]
  %v1766 = vadd.f32 %v1764, 1e-05
  %v1767 = vrsqrt.pop %v1766
  %v1768 = vmul.f32 %v1765, %v1767
  %v1770 = vlaneseq
  %v1771 = vshrl.u32 %v1770, 7
  %v1772 = vsub.s32 0, %v1771
  %v1773 = vrot.slane %v1768, %v1772
  %v1775 = vmul.f32 %v1747, %v1773
  %v1776 = vmul.f32 %v1748, %v1773
  %v1777 = vmul.f32 %v1749, %v1773
  %v1778 = vmul.f32 %v1750, %v1773
  %v1779 = vld [vmem:[%s6] sm:$0x1]
  %v1781 = vlaneseq
  %v1782 = vshrl.u32 %v1781, 7
  %v1783 = vsub.s32 0, %v1782
  %v1784 = vrot.slane %v1779, %v1783
  %v1786 = vadd.f32 %v1775, %v1784
  %v1787 = vadd.f32 %v1776, %v1784
  %v1788 = vadd.f32 %v1777, %v1784
  %v1789 = vadd.f32 %v1778, %v1784
  %v1790 = vmax.f32 %v1786, 0.0
  %v1791 = vmax.f32 %v1787, 0.0
  %v1792 = vmax.f32 %v1788, 0.0
  %v1793 = vmax.f32 %v1789, 0.0
  %v1794 = vpack.c.bf16 %v1791, %v1790
  %v1795 = vpack.c.bf16 %v1793, %v1792
  %v1798 = vunpack.c.l.b16 %v1794
  %v1799 = vunpack.c.h.b16 %v1794
  %v1800 = vunpack.c.l.b16 %v1795
  %v1801 = vunpack.c.h.b16 %v1795
  %v1802 = vpack.c.b16 %v1798, %v1798
  %v1803 = vpack.c.b16 %v1799, %v1799
  %v1804 = vpack.c.b16 %v1800, %v1800
  %v1805 = vpack.c.b16 %v1801, %v1801
  %1810 = vst [vmem:[#allocation2 + $0x8] sm:$0xf] %v1802
  %1811 = vst [vmem:[#allocation2 + $0xc] sm:$0xf] %v1803
  %1812 = vst [vmem:[#allocation2 + $0x20] sm:$0xf] %v1804
  %1813 = vst [vmem:[#allocation2 + $0x24] sm:$0xf] %v1805
  %v1814 = vld [vmem:[#allocation2 + $0x4] sm:$0x8]
  %v1815 = vld [vmem:[#allocation2 + $0x8] sm:$0xf]
  %v1816 = vld [vmem:[#allocation2 + $0xc] sm:$0xf]
  %v1817 = vld [vmem:[#allocation2 + $0x1c] sm:$0x8]
  %v1818 = vld [vmem:[#allocation2 + $0x20] sm:$0xf]
  %v1819 = vld [vmem:[#allocation2 + $0x24] sm:$0xf]
  %v1821 = vshrl.u32 %v1814, 16
  %v1823 = vrot.slane %v1821, 7
  %v1824 = vrot.slane %v1823, 4
  %v1826 = vshrl.u32 %v1815, 16
  %v1828 = vrot.slane %v1826, 7
  %v1829 = vshll.u32 %v1815, 16
  %v1831 = vor.u32 %v1828, %v1829
  %v1832 = vsel %vm195, %v1824, %v1831
  %v1833 = vrot.slane %v1828, 4
  %v1835 = vshrl.u32 %v1816, 16
  %v1837 = vrot.slane %v1835, 7
  %v1838 = vshll.u32 %v1816, 16
  %v1840 = vor.u32 %v1837, %v1838
  %v1841 = vsel %vm195, %v1833, %v1840
  %v1843 = vshrl.u32 %v1817, 16
  %v1845 = vrot.slane %v1843, 7
  %v1846 = vrot.slane %v1845, 4
  %v1848 = vshrl.u32 %v1818, 16
  %v1850 = vrot.slane %v1848, 7
  %v1851 = vshll.u32 %v1818, 16
  %v1853 = vor.u32 %v1850, %v1851
  %v1854 = vsel %vm195, %v1846, %v1853
  %v1855 = vrot.slane %v1850, 4
  %v1857 = vshrl.u32 %v1819, 16
  %v1859 = vrot.slane %v1857, 7
  %v1860 = vshll.u32 %v1819, 16
  %v1862 = vor.u32 %v1859, %v1860
  %v1863 = vsel %vm195, %v1855, %v1862
  %v1864 = vunpack.c.l.b16 %v1832
  %v1865 = vunpack.c.l.b16 %v1841
  %v1866 = vunpack.c.l.b16 %v1854
  %v1867 = vunpack.c.l.b16 %v1863
  %v1868 = vpack.c.b16 %v1865, %v1864
  %v1869 = vpack.c.b16 %v1867, %v1866
  %v1876 = vunpack.c.l.b16 %v1815
  %v1877 = vunpack.c.l.b16 %v1816
  %v1878 = vunpack.c.l.b16 %v1818
  %v1879 = vunpack.c.l.b16 %v1819
  %v1880 = vpack.c.b16 %v1877, %v1876
  %v1881 = vpack.c.b16 %v1879, %v1878
  %v1884 = vld [vmem:[%s7] sm:$0xf]
  %v1885 = vld [vmem:[%s7 + $0x4] sm:$0xf]
  %v1886 = vld [vmem:[%s7 + $0x8] sm:$0xf]
  %v1887 = vld [vmem:[%s7 + $0xc] sm:$0xf]
  %v1888 = vld [vmem:[%s7 + $0x10] sm:$0xf]
  %v1889 = vld [vmem:[%s7 + $0x14] sm:$0xf]
  %v1890 = vld [vmem:[%s7 + $0x18] sm:$0xf]
  %v1891 = vld [vmem:[%s7 + $0x1c] sm:$0xf]
  %v1892 = vld [vmem:[%s7 + $0x20] sm:$0xf]
  %v1893 = vld [vmem:[%s7 + $0x24] sm:$0xf]
  %v1894 = vld [vmem:[%s7 + $0x28] sm:$0xf]
  %v1895 = vld [vmem:[%s7 + $0x2c] sm:$0xf]
  %v1896 = vld [vmem:[%s7 + $0x30] sm:$0xf]
  %v1897 = vld [vmem:[%s7 + $0x34] sm:$0xf]
  %v1898 = vld [vmem:[%s7 + $0x38] sm:$0xf]
  %v1899 = vld [vmem:[%s7 + $0x3c] sm:$0xf]
  %v1900 = vld [vmem:[%s7 + $0x40] sm:$0xf]
  %v1901 = vld [vmem:[%s7 + $0x44] sm:$0xf]
  %v1902 = vld [vmem:[%s7 + $0x48] sm:$0xf]
  %v1903 = vld [vmem:[%s7 + $0x4c] sm:$0xf]
  %v1904 = vld [vmem:[%s7 + $0x50] sm:$0xf]
  %v1905 = vld [vmem:[%s7 + $0x54] sm:$0xf]
  %v1906 = vld [vmem:[%s7 + $0x58] sm:$0xf]
  %v1907 = vld [vmem:[%s7 + $0x5c] sm:$0xf]
  %v1908 = vld [vmem:[%s7 + $0x60] sm:$0xf]
  %v1909 = vld [vmem:[%s7 + $0x64] sm:$0xf]
  %v1910 = vld [vmem:[%s7 + $0x68] sm:$0xf]
  %v1911 = vld [vmem:[%s7 + $0x6c] sm:$0xf]
  %v1912 = vld [vmem:[%s7 + $0x70] sm:$0xf]
  %v1913 = vld [vmem:[%s7 + $0x74] sm:$0xf]
  %v1914 = vld [vmem:[%s7 + $0x78] sm:$0xf]
  %v1915 = vld [vmem:[%s7 + $0x7c] sm:$0xf]
  %v1916 = vld [vmem:[#allocation2 + $0x10] sm:$0x1]
  %v1917 = vld [vmem:[#allocation2 + $0x28] sm:$0x1]
  %v1918 = vrot.slane %v1826, 4
  %v1919 = vrot.slane %v1829, 5
  %v1920 = vor.u32 %v1918, %v1919
  %v1921 = vrot.slane %v1920, 4
  %v1922 = vrot.slane %v1838, 5
  %v1923 = vsel %vm578, %v1921, %v1922
  %v1924 = vrot.slane %v1835, 4
  %v1925 = vor.u32 %v1924, %v1922
  %v1926 = vrot.slane %v1925, 4
  %v1928 = vshll.u32 %v1916, 16
  %v1930 = vrot.slane %v1928, 5
  %v1931 = vsel %vm578, %v1926, %v1930
  %v1932 = vrot.slane %v1848, 4
  %v1933 = vrot.slane %v1851, 5
  %v1934 = vor.u32 %v1932, %v1933
  %v1935 = vrot.slane %v1934, 4
  %v1936 = vrot.slane %v1860, 5
  %v1937 = vsel %vm578, %v1935, %v1936
  %v1938 = vrot.slane %v1857, 4
  %v1939 = vor.u32 %v1938, %v1936
  %v1940 = vrot.slane %v1939, 4
  %v1942 = vshll.u32 %v1917, 16
  %v1944 = vrot.slane %v1942, 5
  %v1945 = vsel %vm578, %v1940, %v1944
  %v1946 = vld [vmem:[%s7 + $0x80] sm:$0xf]
  %v1947 = vld [vmem:[%s7 + $0x84] sm:$0xf]
  %v1948 = vld [vmem:[%s7 + $0x88] sm:$0xf]
  %v1949 = vld [vmem:[%s7 + $0x8c] sm:$0xf]
  %v1950 = vld [vmem:[%s7 + $0x90] sm:$0xf]
  %v1951 = vld [vmem:[%s7 + $0x94] sm:$0xf]
  %v1952 = vld [vmem:[%s7 + $0x98] sm:$0xf]
  %v1953 = vld [vmem:[%s7 + $0x9c] sm:$0xf]
  %v1954 = vld [vmem:[%s7 + $0xa0] sm:$0xf]
  %v1955 = vld [vmem:[%s7 + $0xa4] sm:$0xf]
  %v1956 = vld [vmem:[%s7 + $0xa8] sm:$0xf]
  %v1957 = vld [vmem:[%s7 + $0xac] sm:$0xf]
  %v1958 = vld [vmem:[%s7 + $0xb0] sm:$0xf]
  %v1959 = vld [vmem:[%s7 + $0xb4] sm:$0xf]
  %v1960 = vld [vmem:[%s7 + $0xb8] sm:$0xf]
  %v1961 = vld [vmem:[%s7 + $0xbc] sm:$0xf]
  %v1962 = vunpack.c.l.b16 %v1923
  %v1963 = vunpack.c.l.b16 %v1931
  %v1964 = vunpack.c.l.b16 %v1937
  %v1965 = vunpack.c.l.b16 %v1945
  %v1966 = vpack.c.b16 %v1963, %v1962
  %v1967 = vpack.c.b16 %v1965, %v1964
  %v1986 = vunpack.c.l.b16 %v1946
  %v1987 = vunpack.c.l.b16 %v1947
  %v1988 = vunpack.c.l.b16 %v1948
  %v1989 = vunpack.c.l.b16 %v1949
  %v1990 = vunpack.c.l.b16 %v1950
  %v1991 = vunpack.c.l.b16 %v1951
  %v1992 = vunpack.c.l.b16 %v1952
  %v1993 = vunpack.c.l.b16 %v1953
  %v1994 = vunpack.c.l.b16 %v1954
  %v1995 = vunpack.c.l.b16 %v1955
  %v1996 = vunpack.c.l.b16 %v1956
  %v1997 = vunpack.c.l.b16 %v1957
  %v1998 = vunpack.c.l.b16 %v1958
  %v1999 = vunpack.c.l.b16 %v1959
  %v2000 = vunpack.c.l.b16 %v1960
  %v2001 = vunpack.c.l.b16 %v1961
  %v2002 = vpack.c.b16 %v1987, %v1986
  %v2003 = vpack.c.b16 %v1989, %v1988
  %v2004 = vpack.c.b16 %v1991, %v1990
  %v2005 = vpack.c.b16 %v1993, %v1992
  %v2006 = vpack.c.b16 %v1995, %v1994
  %v2007 = vpack.c.b16 %v1997, %v1996
  %v2008 = vpack.c.b16 %v1999, %v1998
  %v2009 = vpack.c.b16 %v2001, %v2000
  %2018 = vmatprep.subr.bf16.mxu0 0
  %2019 = vmatpush1.bf16.msra.mxu0 %v2009
  %2020 = vmatprep.subr.bf16.mxu0 0
  %2021 = vmatpush1.bf16.msra.mxu0 %v2008
  %2022 = vmatprep.subr.bf16.mxu0 0
  %2023 = vmatpush1.bf16.msra.mxu0 %v2007
  %2024 = vmatprep.subr.bf16.mxu0 0
  %2025 = vmatpush1.bf16.msra.mxu0 %v2006
  %2026 = vmatprep.subr.bf16.mxu0 0
  %2027 = vmatpush1.bf16.msra.mxu0 %v2005
  %2028 = vmatprep.subr.bf16.mxu0 0
  %2029 = vmatpush1.bf16.msra.mxu0 %v2004
  %2030 = vmatprep.subr.bf16.mxu0 0
  %2031 = vmatpush1.bf16.msra.mxu0 %v2003
  %2032 = vmatprep.subr.bf16.mxu0 0
  %2033 = vmatpush1.bf16.msra.mxu0 %v2002
  %2034 = vmatprep.subr.bf16.mxu0 0
  %2035 = vmatpush2.bf16.msra.mxu0 0
  %2036 = vmatprep.subr.bf16.mxu0 0
  %2037 = vmatpush2.bf16.msra.mxu0 0
  %2038 = vmatprep.subr.bf16.mxu0 0
  %2039 = vmatpush2.bf16.msra.mxu0 0
  %2040 = vmatprep.subr.bf16.mxu0 0
  %2041 = vmatpush2.bf16.msra.mxu0 0
  %2042 = vmatprep.subr.bf16.mxu0 0
  %2043 = vmatpush2.bf16.msra.mxu0 0
  %2044 = vmatprep.subr.bf16.mxu0 0
  %2045 = vmatpush2.bf16.msra.mxu0 0
  %2046 = vmatprep.subr.bf16.mxu0 0
  %2047 = vmatpush2.bf16.msra.mxu0 0
  %2048 = vmatprep.subr.bf16.mxu0 0
  %2049 = vmatpush2.bf16.msra.mxu0 0
  %2050 = vmatprep.mubr.bf16.mxu0 0
  %2051 = vmatmul.mubr.bf16.gmra.mxu0 %v1966
  %v2052 = vpop.f32.mrf.mxu0
  %v2053 = vadd.f32 0.0, %v2052
  %v2054 = vpop.f32.mrf.mxu0
  %v2055 = vpop.f32.mrf.mxu0
  %v2056 = vadd.f32 0.0, %v2055
  %v2057 = vpop.f32.mrf.mxu0
  %2058 = vmatprep.mubr.bf16.mxu0 0
  %2059 = vmatmul.mubr.bf16.gmra.mxu0 %v1967
  %v2060 = vpop.f32.mrf.mxu0
  %v2061 = vadd.f32 0.0, %v2060
  %v2062 = vpop.f32.mrf.mxu0
  %v2063 = vpop.f32.mrf.mxu0
  %v2064 = vadd.f32 0.0, %v2063
  %v2065 = vpop.f32.mrf.mxu0
  %2066 = vdwg.mxu0
  %v2099 = vunpack.c.l.b16 %v1884
  %v2100 = vunpack.c.l.b16 %v1885
  %v2101 = vunpack.c.l.b16 %v1886
  %v2102 = vunpack.c.l.b16 %v1887
  %v2103 = vunpack.c.l.b16 %v1888
  %v2104 = vunpack.c.l.b16 %v1889
  %v2105 = vunpack.c.l.b16 %v1890
  %v2106 = vunpack.c.l.b16 %v1891
  %v2107 = vunpack.c.l.b16 %v1892
  %v2108 = vunpack.c.l.b16 %v1893
  %v2109 = vunpack.c.l.b16 %v1894
  %v2110 = vunpack.c.l.b16 %v1895
  %v2111 = vunpack.c.l.b16 %v1896
  %v2112 = vunpack.c.l.b16 %v1897
  %v2113 = vunpack.c.l.b16 %v1898
  %v2114 = vunpack.c.l.b16 %v1899
  %v2115 = vunpack.c.l.b16 %v1900
  %v2116 = vunpack.c.l.b16 %v1901
  %v2117 = vunpack.c.l.b16 %v1902
  %v2118 = vunpack.c.l.b16 %v1903
  %v2119 = vunpack.c.l.b16 %v1904
  %v2120 = vunpack.c.l.b16 %v1905
  %v2121 = vunpack.c.l.b16 %v1906
  %v2122 = vunpack.c.l.b16 %v1907
  %v2123 = vunpack.c.l.b16 %v1908
  %v2124 = vunpack.c.l.b16 %v1909
  %v2125 = vunpack.c.l.b16 %v1910
  %v2126 = vunpack.c.l.b16 %v1911
  %v2127 = vunpack.c.l.b16 %v1912
  %v2128 = vunpack.c.l.b16 %v1913
  %v2129 = vunpack.c.l.b16 %v1914
  %v2130 = vunpack.c.l.b16 %v1915
  %v2131 = vpack.c.b16 %v2100, %v2099
  %v2132 = vpack.c.b16 %v2102, %v2101
  %v2133 = vpack.c.b16 %v2104, %v2103
  %v2134 = vpack.c.b16 %v2106, %v2105
  %v2135 = vpack.c.b16 %v2108, %v2107
  %v2136 = vpack.c.b16 %v2110, %v2109
  %v2137 = vpack.c.b16 %v2112, %v2111
  %v2138 = vpack.c.b16 %v2114, %v2113
  %v2139 = vpack.c.b16 %v2116, %v2115
  %v2140 = vpack.c.b16 %v2118, %v2117
  %v2141 = vpack.c.b16 %v2120, %v2119
  %v2142 = vpack.c.b16 %v2122, %v2121
  %v2143 = vpack.c.b16 %v2124, %v2123
  %v2144 = vpack.c.b16 %v2126, %v2125
  %v2145 = vpack.c.b16 %v2128, %v2127
  %v2146 = vpack.c.b16 %v2130, %v2129
  %2163 = vmatprep.subr.bf16.mxu0 0
  %2164 = vmatpush1.bf16.msra.mxu0 %v2138
  %2165 = vmatprep.subr.bf16.mxu0 0
  %2166 = vmatpush1.bf16.msra.mxu0 %v2137
  %2167 = vmatprep.subr.bf16.mxu0 0
  %2168 = vmatpush1.bf16.msra.mxu0 %v2136
  %2169 = vmatprep.subr.bf16.mxu0 0
  %2170 = vmatpush1.bf16.msra.mxu0 %v2135
  %2171 = vmatprep.subr.bf16.mxu0 0
  %2172 = vmatpush1.bf16.msra.mxu0 %v2134
  %2173 = vmatprep.subr.bf16.mxu0 0
  %2174 = vmatpush1.bf16.msra.mxu0 %v2133
  %2175 = vmatprep.subr.bf16.mxu0 0
  %2176 = vmatpush1.bf16.msra.mxu0 %v2132
  %2177 = vmatprep.subr.bf16.mxu0 0
  %2178 = vmatpush1.bf16.msra.mxu0 %v2131
  %2179 = vmatprep.subr.bf16.mxu0 0
  %2180 = vmatpush2.bf16.msra.mxu0 %v2146
  %2181 = vmatprep.subr.bf16.mxu0 0
  %2182 = vmatpush2.bf16.msra.mxu0 %v2145
  %2183 = vmatprep.subr.bf16.mxu0 0
  %2184 = vmatpush2.bf16.msra.mxu0 %v2144
  %2185 = vmatprep.subr.bf16.mxu0 0
  %2186 = vmatpush2.bf16.msra.mxu0 %v2143
  %2187 = vmatprep.subr.bf16.mxu0 0
  %2188 = vmatpush2.bf16.msra.mxu0 %v2142
  %2189 = vmatprep.subr.bf16.mxu0 0
  %2190 = vmatpush2.bf16.msra.mxu0 %v2141
  %2191 = vmatprep.subr.bf16.mxu0 0
  %2192 = vmatpush2.bf16.msra.mxu0 %v2140
  %2193 = vmatprep.subr.bf16.mxu0 0
  %2194 = vmatpush2.bf16.msra.mxu0 %v2139
  %2195 = vmatprep.mubr.bf16.mxu0 %v1880
  %2196 = vmatmul.mubr.bf16.gmra.mxu0 %v1868
  %v2197 = vpop.f32.mrf.mxu0
  %v2198 = vadd.f32 %v2053, %v2197
  %v2199 = vpop.f32.mrf.mxu0
  %v2200 = vpop.f32.mrf.mxu0
  %v2201 = vadd.f32 %v2056, %v2200
  %v2202 = vpop.f32.mrf.mxu0
  %2203 = vmatprep.mubr.bf16.mxu0 %v1881
  %2204 = vmatmul.mubr.bf16.gmra.mxu0 %v1869
  %v2205 = vpop.f32.mrf.mxu0
  %v2206 = vadd.f32 %v2061, %v2205
  %v2207 = vpop.f32.mrf.mxu0
  %v2208 = vpop.f32.mrf.mxu0
  %v2209 = vadd.f32 %v2064, %v2208
  %v2210 = vpop.f32.mrf.mxu0
  %2211 = vdwg.mxu0
  %v2212 = vadd.f32 %v2198, %v2201
  %v2213 = vadd.f32 %v2212, %v2206
  %v2214 = vadd.f32 %v2213, %v2209
  %v2215 = vrot.slane %v2214, 4
  %v2216 = vadd.f32 %v2214, %v2215
  %v2217 = vrot.slane %v2216, 2
  %v2218 = vadd.f32 %v2216, %v2217
  %v2219 = vrot.slane %v2218, 1
  %v2220 = vadd.f32 %v2218, %v2219
  %v2221 = vmul.f32 %v2220, 0.03125
  %v2222 = vsub.f32 %v2198, %v2221
  %v2223 = vsub.f32 %v2201, %v2221
  %v2224 = vsub.f32 %v2206, %v2221
  %v2225 = vsub.f32 %v2209, %v2221
  %v2226 = vmul.f32 %v2222, %v2222
  %v2227 = vmul.f32 %v2223, %v2223
  %v2228 = vmul.f32 %v2224, %v2224
  %v2229 = vmul.f32 %v2225, %v2225
  %v2230 = vadd.f32 %v2226, %v2227
  %v2231 = vadd.f32 %v2230, %v2228
  %v2232 = vadd.f32 %v2231, %v2229
  %v2233 = vrot.slane %v2232, 4
  %v2234 = vadd.f32 %v2232, %v2233
  %v2235 = vrot.slane %v2234, 2
  %v2236 = vadd.f32 %v2234, %v2235
  %v2237 = vrot.slane %v2236, 1
  %v2238 = vadd.f32 %v2236, %v2237
  %v2239 = vmul.f32 %v2238, 0.03125
  %v2240 = vld [vmem:[%s8] sm:$0x1]
  %v2241 = vadd.f32 %v2239, 1e-05
  %v2242 = vrsqrt.pop %v2241
  %v2243 = vmul.f32 %v2240, %v2242
  %v2245 = vlaneseq
  %v2246 = vshrl.u32 %v2245, 7
  %v2247 = vsub.s32 0, %v2246
  %v2248 = vrot.slane %v2243, %v2247
  %v2250 = vmul.f32 %v2222, %v2248
  %v2251 = vmul.f32 %v2223, %v2248
  %v2252 = vmul.f32 %v2224, %v2248
  %v2253 = vmul.f32 %v2225, %v2248
  %v2254 = vld [vmem:[%s9] sm:$0x1]
  %v2256 = vlaneseq
  %v2257 = vshrl.u32 %v2256, 7
  %v2258 = vsub.s32 0, %v2257
  %v2259 = vrot.slane %v2254, %v2258
  %v2261 = vadd.f32 %v2250, %v2259
  %v2262 = vadd.f32 %v2251, %v2259
  %v2263 = vadd.f32 %v2252, %v2259
  %v2264 = vadd.f32 %v2253, %v2259
  %2265 = vst [vmem:[%s13] sm:$0xff] %v2261
  %2266 = vst [vmem:[%s13 + $0x8] sm:$0xff] %v2262
  %2267 = vst [vmem:[%s13 + $0x10] sm:$0xff] %v2263
  %2268 = vst [vmem:[%s13 + $0x18] sm:$0xff] %v2264
  %v2269 = vld [vmem:[%s0 + $0x8] sm:$0xf]
  %v2270 = vld [vmem:[%s0 + $0xc] sm:$0xf]
  %v2271 = vld [vmem:[%s0 + $0x20] sm:$0xf]
  %v2272 = vld [vmem:[%s0 + $0x24] sm:$0xf]
  %v2273 = vld [vmem:[%s10] sm:$0xf]
  %v2274 = vld [vmem:[%s10 + $0x4] sm:$0xf]
  %v2275 = vld [vmem:[%s10 + $0x8] sm:$0xf]
  %v2276 = vld [vmem:[%s10 + $0xc] sm:$0xf]
  %v2277 = vld [vmem:[%s10 + $0x10] sm:$0xf]
  %v2278 = vld [vmem:[%s10 + $0x14] sm:$0xf]
  %v2279 = vld [vmem:[%s10 + $0x18] sm:$0xf]
  %v2280 = vld [vmem:[%s10 + $0x1c] sm:$0xf]
  %v2281 = vld [vmem:[%s10 + $0x20] sm:$0xf]
  %v2282 = vld [vmem:[%s10 + $0x24] sm:$0xf]
  %v2283 = vld [vmem:[%s10 + $0x28] sm:$0xf]
  %v2284 = vld [vmem:[%s10 + $0x2c] sm:$0xf]
  %v2285 = vld [vmem:[%s10 + $0x30] sm:$0xf]
  %v2286 = vld [vmem:[%s10 + $0x34] sm:$0xf]
  %v2287 = vld [vmem:[%s10 + $0x38] sm:$0xf]
  %v2288 = vld [vmem:[%s10 + $0x3c] sm:$0xf]
  %v2293 = vunpack.c.l.b16 %v2269
  %v2294 = vunpack.c.l.b16 %v2270
  %v2295 = vunpack.c.l.b16 %v2271
  %v2296 = vunpack.c.l.b16 %v2272
  %v2297 = vpack.c.b16 %v2294, %v2293
  %v2298 = vpack.c.b16 %v2296, %v2295
  %v2317 = vunpack.c.l.b16 %v2273
  %v2318 = vunpack.c.l.b16 %v2274
  %v2319 = vunpack.c.l.b16 %v2275
  %v2320 = vunpack.c.l.b16 %v2276
  %v2321 = vunpack.c.l.b16 %v2277
  %v2322 = vunpack.c.l.b16 %v2278
  %v2323 = vunpack.c.l.b16 %v2279
  %v2324 = vunpack.c.l.b16 %v2280
  %v2325 = vunpack.c.l.b16 %v2281
  %v2326 = vunpack.c.l.b16 %v2282
  %v2327 = vunpack.c.l.b16 %v2283
  %v2328 = vunpack.c.l.b16 %v2284
  %v2329 = vunpack.c.l.b16 %v2285
  %v2330 = vunpack.c.l.b16 %v2286
  %v2331 = vunpack.c.l.b16 %v2287
  %v2332 = vunpack.c.l.b16 %v2288
  %v2333 = vpack.c.b16 %v2318, %v2317
  %v2334 = vpack.c.b16 %v2320, %v2319
  %v2335 = vpack.c.b16 %v2322, %v2321
  %v2336 = vpack.c.b16 %v2324, %v2323
  %v2337 = vpack.c.b16 %v2326, %v2325
  %v2338 = vpack.c.b16 %v2328, %v2327
  %v2339 = vpack.c.b16 %v2330, %v2329
  %v2340 = vpack.c.b16 %v2332, %v2331
  %2349 = vmatprep.subr.bf16.mxu0 0
  %2350 = vmatpush1.bf16.msra.mxu0 %v2340
  %2351 = vmatprep.subr.bf16.mxu0 0
  %2352 = vmatpush1.bf16.msra.mxu0 %v2339
  %2353 = vmatprep.subr.bf16.mxu0 0
  %2354 = vmatpush1.bf16.msra.mxu0 %v2338
  %2355 = vmatprep.subr.bf16.mxu0 0
  %2356 = vmatpush1.bf16.msra.mxu0 %v2337
  %2357 = vmatprep.subr.bf16.mxu0 0
  %2358 = vmatpush1.bf16.msra.mxu0 %v2336
  %2359 = vmatprep.subr.bf16.mxu0 0
  %2360 = vmatpush1.bf16.msra.mxu0 %v2335
  %2361 = vmatprep.subr.bf16.mxu0 0
  %2362 = vmatpush1.bf16.msra.mxu0 %v2334
  %2363 = vmatprep.subr.bf16.mxu0 0
  %2364 = vmatpush1.bf16.msra.mxu0 %v2333
  %2365 = vmatprep.subr.bf16.mxu0 0
  %2366 = vmatpush2.bf16.msra.mxu0 0
  %2367 = vmatprep.subr.bf16.mxu0 0
  %2368 = vmatpush2.bf16.msra.mxu0 0
  %2369 = vmatprep.subr.bf16.mxu0 0
  %2370 = vmatpush2.bf16.msra.mxu0 0
  %2371 = vmatprep.subr.bf16.mxu0 0
  %2372 = vmatpush2.bf16.msra.mxu0 0
  %2373 = vmatprep.subr.bf16.mxu0 0
  %2374 = vmatpush2.bf16.msra.mxu0 0
  %2375 = vmatprep.subr.bf16.mxu0 0
  %2376 = vmatpush2.bf16.msra.mxu0 0
  %2377 = vmatprep.subr.bf16.mxu0 0
  %2378 = vmatpush2.bf16.msra.mxu0 0
  %2379 = vmatprep.subr.bf16.mxu0 0
  %2380 = vmatpush2.bf16.msra.mxu0 0
  %2381 = vmatprep.mubr.bf16.mxu0 0
  %2382 = vmatmul.mubr.bf16.gmra.mxu0 %v2297
  %v2383 = vpop.f32.mrf.mxu0
  %v2384 = vadd.f32 0.0, %v2383
  %v2385 = vpop.f32.mrf.mxu0
  %v2386 = vpop.f32.mrf.mxu0
  %v2387 = vadd.f32 0.0, %v2386
  %v2388 = vpop.f32.mrf.mxu0
  %2389 = vmatprep.mubr.bf16.mxu0 0
  %2390 = vmatmul.mubr.bf16.gmra.mxu0 %v2298
  %v2391 = vpop.f32.mrf.mxu0
  %v2392 = vadd.f32 0.0, %v2391
  %v2393 = vpop.f32.mrf.mxu0
  %v2394 = vpop.f32.mrf.mxu0
  %v2395 = vadd.f32 0.0, %v2394
  %v2396 = vpop.f32.mrf.mxu0
  %2397 = vdwg.mxu0
  %v2398 = vadd.f32 %v2384, %v2387
  %v2399 = vadd.f32 %v2398, %v2392
  %v2400 = vadd.f32 %v2399, %v2395
  %v2401 = vrot.slane %v2400, 4
  %v2402 = vadd.f32 %v2400, %v2401
  %v2403 = vrot.slane %v2402, 2
  %v2404 = vadd.f32 %v2402, %v2403
  %v2405 = vrot.slane %v2404, 1
  %v2406 = vadd.f32 %v2404, %v2405
  %v2407 = vmul.f32 %v2406, 0.03125
  %v2408 = vsub.f32 %v2384, %v2407
  %v2409 = vsub.f32 %v2387, %v2407
  %v2410 = vsub.f32 %v2392, %v2407
  %v2411 = vsub.f32 %v2395, %v2407
  %v2412 = vmul.f32 %v2408, %v2408
  %v2413 = vmul.f32 %v2409, %v2409
  %v2414 = vmul.f32 %v2410, %v2410
  %v2415 = vmul.f32 %v2411, %v2411
  %v2416 = vadd.f32 %v2412, %v2413
  %v2417 = vadd.f32 %v2416, %v2414
  %v2418 = vadd.f32 %v2417, %v2415
  %v2419 = vrot.slane %v2418, 4
  %v2420 = vadd.f32 %v2418, %v2419
  %v2421 = vrot.slane %v2420, 2
  %v2422 = vadd.f32 %v2420, %v2421
  %v2423 = vrot.slane %v2422, 1
  %v2424 = vadd.f32 %v2422, %v2423
  %v2425 = vmul.f32 %v2424, 0.03125
  %v2426 = vld [vmem:[%s11] sm:$0x1]
  %v2427 = vadd.f32 %v2425, 1e-05
  %v2428 = vrsqrt.pop %v2427
  %v2429 = vmul.f32 %v2426, %v2428
  %v2431 = vlaneseq
  %v2432 = vshrl.u32 %v2431, 7
  %v2433 = vsub.s32 0, %v2432
  %v2434 = vrot.slane %v2429, %v2433
  %v2436 = vmul.f32 %v2408, %v2434
  %v2437 = vmul.f32 %v2409, %v2434
  %v2438 = vmul.f32 %v2410, %v2434
  %v2439 = vmul.f32 %v2411, %v2434
  %v2440 = vld [vmem:[%s12] sm:$0x1]
  %v2442 = vlaneseq
  %v2443 = vshrl.u32 %v2442, 7
  %v2444 = vsub.s32 0, %v2443
  %v2445 = vrot.slane %v2440, %v2444
  %v2447 = vadd.f32 %v2436, %v2445
  %v2448 = vadd.f32 %v2437, %v2445
  %v2449 = vadd.f32 %v2438, %v2445
  %v2450 = vadd.f32 %v2439, %v2445
  %v2451 = vld [vmem:[%s13] sm:$0xff]
  %v2452 = vld [vmem:[%s13 + $0x8] sm:$0xff]
  %v2453 = vld [vmem:[%s13 + $0x10] sm:$0xff]
  %v2454 = vld [vmem:[%s13 + $0x18] sm:$0xff]
  %v2455 = vadd.f32 %v2451, %v2447
  %v2456 = vadd.f32 %v2452, %v2448
  %v2457 = vadd.f32 %v2453, %v2449
  %v2458 = vadd.f32 %v2454, %v2450
  %v2459 = vmax.f32 %v2455, 0.0
  %v2460 = vmax.f32 %v2456, 0.0
  %v2461 = vmax.f32 %v2457, 0.0
  %v2462 = vmax.f32 %v2458, 0.0
  %2463 = vst [vmem:[%s13] sm:$0xff] %v2459
  %2464 = vst [vmem:[%s13 + $0x8] sm:$0xff] %v2460
  %2465 = vst [vmem:[%s13 + $0x10] sm:$0xff] %v2461
  %2466 = vst [vmem:[%s13 + $0x18] sm:$0xff] %v2462
  // Predicated region
  $region54: #{residual_block.1} parent=0 // pred_check
    _
  $region55: #{residual_block.1} parent=0 // pred_check_branch
    %2468 = sbr.rel (0) target = $region57
  $region56: #{residual_block.1} parent=0 // pred_region
    _
  $region57: #{residual_block.1} parent=0 // pred_fallthru
    _
  // Predicated region
  $region58: #{residual_block.1} parent=0 // pred_check
    _
  $region59: #{residual_block.1} parent=0 // pred_check_branch
    %2470 = sbr.rel (0) target = $region61
  $region60: #{residual_block.1} parent=0 // pred_region
    _
  $region61: #{residual_block.1} parent=0 // pred_fallthru
    _

</llo_original>
